<compile_context>
chip_gen: v6e
topology: v6e:2x2x1
jax: 0.10.0
libtpu: 0.0.40
codegen_flags: <defaults>
</compile_context>

<pallas_src>
import math

import jax
import jax.numpy as jnp
from jax.experimental import pallas as pl
from jax.experimental.pallas import tpu as pltpu

# ---- small, module-consistent hyper-parameters ----
BATCH = 2      # batch_size
D0    = 8      # raw feature dim fed to FCNN_layer
D     = 32     # model dim d
N_SEQ = 16     # sequence length n
M_H   = 16     # key/query dim
M_V   = 16     # value dim
R     = 32     # FFN hidden dim r
H     = 2      # attention heads per TransformerBlock
L     = 2      # number of TransformerBlocks
K     = 4      # number of classes (classifier emits K+1 logits)
CPAD  = 128    # lane-dense padding of the (K+1)-wide classifier output
BN    = BATCH * N_SEQ   # batch folded onto the lane axis

# ---- static row layout of the single lane-dense weight slab (all offsets 8-aligned) ----
KQ        = H * M_H            # 32  stacked K (or Q) rows per layer
HV        = H * M_V            # 32  stacked V rows per layer
KQV_ROWS  = 2 * KQ + HV        # 96  [K heads ; Q heads ; V heads]
W1_OFF    = KQV_ROWS + D       # 128 (within a layer block)
W2_OFF    = W1_OFF + R         # 160
LAYER_ROWS = W2_OFF + D        # 192 rows per transformer layer

OFF_WF    = 0                                  # (D, D0+1)        rows   0..31
OFF_LAYER = OFF_WF + D                         # layer blocks     rows  32..415
OFF_WC1   = OFF_LAYER + L * LAYER_ROWS         # (1, D+1)         row   416 (padded to 424)
OFF_WC2T  = OFF_WC1 + 8                        # (N_SEQ, CPAD)    rows 424..439
OFF_BC2   = OFF_WC2T + N_SEQ                   # (1, CPAD)        row   440 (padded to 448)
OFF_NEGM  = OFF_BC2 + 8                        # (BN, BN) additive mask  rows 448..479
OFF_ZEROM = OFF_NEGM + BN                      # (BN, BN) 0/1 mask       rows 480..511
W_ROWS    = OFF_ZEROM + BN                     # 512 rows x 128 lanes x f32 = 256 KiB


def transformer_kernel(x_ref, w_ref, out_ref, y2_ref):
    """Whole forward pass in one invocation; everything resident in VMEM.

    Layout: features on sublanes, (batch * sequence) on lanes.
      x_ref  : (D0+1, BN)   last row is ones (FCNN bias folded into the matmul)
      w_ref  : (W_ROWS, 128) packed lane-dense weight slab (see offsets above)
      out_ref: (BATCH, CPAD) lane-dense logits (cols >= K+1 are zero)
      y2_ref : (BATCH, N_SEQ) VMEM scratch for the classifier lane->sublane fold
    """
    f32 = jnp.float32
    inv_sqrt_mh = 1.0 / math.sqrt(M_H)

    # Constant block-diagonal masks over the folded (batch*seq) axis (packed at init):
    #   neg_mask : 0 within-batch, -1e30 on cross-batch (key,query) pairs
    #   zero_mask: 1 within-batch, 0 cross-batch  (exact zeroing after exp)
    neg_mask = w_ref[OFF_NEGM:OFF_NEGM + BN, 0:BN]
    zero_mask = w_ref[OFF_ZEROM:OFF_ZEROM + BN, 0:BN]

    # FCNN_layer: relu(Wf @ x + bf)  (bias via the appended ones row of x)
    wf = w_ref[OFF_WF:OFF_WF + D, 0:D0 + 1]                                  # (D, D0+1)
    cur = jnp.maximum(jnp.dot(wf, x_ref[...], preferred_element_type=f32), 0.0)  # (D, BN)

    for li in range(L):
        base = OFF_LAYER + li * LAYER_ROWS

        # ---- multi-head self-attention: one fused K/Q/V projection for all heads ----
        kqv = jnp.dot(w_ref[base:base + KQV_ROWS, 0:D], cur,
                      preferred_element_type=f32)                            # (96, BN)
        k_all = kqv[0:KQ, :]                                                 # (H*M_H, BN)
        q_all = kqv[KQ:2 * KQ, :]                                            # (H*M_H, BN)
        v_all = kqv[2 * KQ:2 * KQ + HV, :]                                   # (H*M_V, BN)
        kT_all = k_all.T                    # (BN, H*M_H): one small XLU transpose per layer

        wo = w_ref[base + KQV_ROWS:base + KQV_ROWS + D, 0:HV]                # (D, H*M_V)

        attn = cur
        for hi in range(H):
            kT = kT_all[:, hi * M_H:(hi + 1) * M_H]                          # (BN, m_h)
            q = q_all[hi * M_H:(hi + 1) * M_H, :]                            # (m_h, BN)
            v = v_all[hi * M_V:(hi + 1) * M_V, :]                            # (m_V, BN)
            # scores = softmax( (k^T q) / sqrt(m_h), dim=-1 ), batched over BN with a
            # block-diagonal mask -> identical to per-batch attention.
            s = jnp.dot(kT, q, preferred_element_type=f32) * inv_sqrt_mh + neg_mask
            s = s - jnp.max(s, axis=-1, keepdims=True)
            e = jnp.exp(s) * zero_mask                                       # exact zeros
            p = e * pl.reciprocal(jnp.sum(e, axis=-1, keepdims=True), approx=True)
            o = jnp.dot(v, p, preferred_element_type=f32)                    # (m_V, BN)
            attn = attn + jnp.dot(wo[:, hi * M_V:(hi + 1) * M_V], o,
                                  preferred_element_type=f32)                # (D, BN)

        # ---- FFN with residual (biases packed as trailing weight columns) ----
        w1b = w_ref[base + W1_OFF:base + W1_OFF + R, 0:D + 1]                # (R, D+1)
        w2b = w_ref[base + W2_OFF:base + W2_OFF + D, 0:R + 1]                # (D, R+1)
        act = jnp.maximum(
            jnp.dot(w1b[:, 0:D], attn, preferred_element_type=f32) + w1b[:, D:D + 1], 0.0)
        cur = attn + jnp.dot(w2b[:, 0:R], act, preferred_element_type=f32) + w2b[:, R:R + 1]

    # ---- classifier: Linear(d, 1) along features, then Linear(n, K+1) (padded to CPAD) ----
    wc1b = w_ref[OFF_WC1:OFF_WC1 + 1, 0:D + 1]                               # (1, D+1)
    y = jnp.dot(wc1b[:, 0:D], cur, preferred_element_type=f32) + wc1b[:, D:D + 1]  # (1, BN)
    # lane -> sublane fold via two static 1-sublane scratch stores (no concatenates)
    for b in range(BATCH):
        y2_ref[b:b + 1, :] = y[:, b * N_SEQ:(b + 1) * N_SEQ]
    wc2T = w_ref[OFF_WC2T:OFF_WC2T + N_SEQ, :]                               # (N_SEQ, CPAD)
    bc2 = w_ref[OFF_BC2:OFF_BC2 + 1, :]                                      # (1, CPAD)
    # single lane-dense (BATCH, CPAD) matmul + store
    out_ref[...] = jnp.dot(y2_ref[...], wc2T, preferred_element_type=f32) + bc2


def pack_params(p):
    """Pack the 15 parameter tensors (+ constant masks) into ONE lane-dense slab.

    Called ONCE at init (hoisted out of the per-call path)."""
    w = jnp.zeros((W_ROWS, CPAD), jnp.float32)
    # FCNN: [Wf | bf]
    w = w.at[OFF_WF:OFF_WF + D, 0:D0 + 1].set(jnp.concatenate([p["wf"], p["bf"]], axis=1))
    for li in range(L):
        base = OFF_LAYER + li * LAYER_ROWS
        wk = p["wk"][li * H:(li + 1) * H].reshape(H * M_H, D)
        wq = p["wq"][li * H:(li + 1) * H].reshape(H * M_H, D)
        wv = p["wv"][li * H:(li + 1) * H].reshape(H * M_V, D)
        w = w.at[base:base + KQV_ROWS, 0:D].set(jnp.concatenate([wk, wq, wv], axis=0))
        wo = jnp.concatenate([p["wo"][li * H + hi] for hi in range(H)], axis=1)  # (D, H*M_V)
        w = w.at[base + KQV_ROWS:base + KQV_ROWS + D, 0:HV].set(wo)
        w = w.at[base + W1_OFF:base + W1_OFF + R, 0:D + 1].set(
            jnp.concatenate([p["w1"][li], p["b1"][li]], axis=1))
        w = w.at[base + W2_OFF:base + W2_OFF + D, 0:R + 1].set(
            jnp.concatenate([p["w2"][li], p["b2"][li]], axis=1))
    w = w.at[OFF_WC1:OFF_WC1 + 1, 0:D + 1].set(jnp.concatenate([p["wc1"], p["bc1"]], axis=1))
    w = w.at[OFF_WC2T:OFF_WC2T + N_SEQ, 0:K + 1].set(p["wc2"].T)
    w = w.at[OFF_BC2:OFF_BC2 + 1, 0:K + 1].set(p["bc2"])
    # block-diagonal attention masks over the folded (batch * seq) lane axis
    pos = jnp.arange(BN) // N_SEQ
    blk = pos[:, None] == pos[None, :]
    w = w.at[OFF_NEGM:OFF_NEGM + BN, 0:BN].set(
        jnp.where(blk, 0.0, -1e30).astype(jnp.float32))
    w = w.at[OFF_ZEROM:OFF_ZEROM + BN, 0:BN].set(blk.astype(jnp.float32))
    return w


@jax.jit
def transformer_forward(x, w_slab):
    # per-call work: only fold the batch onto lanes + append the ones row for the FCNN bias
    x_fold = jnp.transpose(x, (1, 0, 2)).reshape(D0, BN)                    # (D0, B*N)
    x_aug = jnp.concatenate([x_fold, jnp.ones((1, BN), jnp.float32)], axis=0)  # (D0+1, BN)

    vmem = pl.BlockSpec(memory_space=pltpu.MemorySpace.VMEM)   # whole array resident in VMEM
    out_pad = pl.pallas_call(
        transformer_kernel,
        out_shape=jax.ShapeDtypeStruct((BATCH, CPAD), jnp.float32),
        in_specs=[vmem, vmem],
        out_specs=vmem,
        scratch_shapes=[pltpu.VMEM((BATCH, N_SEQ), jnp.float32)],
    )(x_aug, w_slab)
    logits = out_pad[:, :K + 1]                 # label_matrix
    output = jnp.argmax(logits, axis=1)         # mode_c == 'max'
    return output, logits


def init_params(key):
    ks = jax.random.split(key, 12)
    p = {}
    # FCNN_layer linear (d0 -> d)
    p["wf"] = jax.random.normal(ks[0], (D, D0), jnp.float32) * 0.1
    p["bf"] = jax.random.normal(ks[1], (D, 1), jnp.float32) * 0.1
    # SelfAttention weights, stacked over (L * H) heads
    p["wk"] = jax.random.normal(ks[2], (L * H, M_H, D), jnp.float32) * 0.01
    p["wq"] = jax.random.normal(ks[3], (L * H, M_H, D), jnp.float32) * 0.01
    p["wv"] = jax.random.normal(ks[4], (L * H, M_V, D), jnp.float32) * 0.01
    p["wo"] = jax.random.normal(ks[5], (L * H, D, M_V), jnp.float32) * 0.01
    # FFN weights per layer
    p["w1"] = jax.random.normal(ks[6], (L, R, D), jnp.float32) * 0.01
    p["w2"] = jax.random.normal(ks[7], (L, D, R), jnp.float32) * 0.01
    p["b1"] = jnp.zeros((L, R, 1), jnp.float32)
    p["b2"] = jnp.zeros((L, D, 1), jnp.float32)
    # classifier: Linear(d, 1) and Linear(n, K+1)
    p["wc1"] = jax.random.normal(ks[8], (1, D), jnp.float32) * 0.1
    p["bc1"] = jax.random.normal(ks[9], (1, 1), jnp.float32) * 0.1
    p["wc2"] = jax.random.normal(ks[10], (K + 1, N_SEQ), jnp.float32) * 0.1
    p["bc2"] = jax.random.normal(ks[11], (1, K + 1), jnp.float32) * 0.1
    return p


def reference_forward(x, p):
    """Pure-JAX reference with identical semantics to the PyTorch module (for validation)."""
    def one(xb):
        cur = jnp.maximum(p["wf"] @ xb + p["bf"], 0.0)
        for li in range(L):
            attn = cur
            for hi in range(H):
                idx = li * H + hi
                k = p["wk"][idx] @ cur
                q = p["wq"][idx] @ cur
                v = p["wv"][idx] @ cur
                s = (k.T @ q) / math.sqrt(M_H)
                s = jax.nn.softmax(s, axis=-1)
                attn = attn + p["wo"][idx] @ (v @ s)
            act = jnp.maximum(p["w1"][li] @ attn + p["b1"][li], 0.0)
            cur = attn + p["w2"][li] @ act + p["b2"][li]
        y = p["wc1"] @ cur + p["bc1"]
        logits = y @ p["wc2"].T + p["bc2"]
        return logits[0]

    logits = jax.vmap(one)(x)
    return jnp.argmax(logits, axis=1), logits


if __name__ == "__main__":
    key = jax.random.PRNGKey(0)
    kx, kp = jax.random.split(key)
    x = jax.random.normal(kx, (BATCH, D0, N_SEQ), jnp.float32)
    params = init_params(kp)

    # parameters packed ONCE at init (hoisted out of the per-call path)
    w_slab = jax.block_until_ready(pack_params(params))

    output, label_matrix = transformer_forward(x, w_slab)
    output = jax.block_until_ready(output)
    label_matrix = jax.block_until_ready(label_matrix)

    ref_output, ref_logits = reference_forward(x, params)
    assert jnp.allclose(label_matrix, ref_logits, rtol=2e-3, atol=1e-4), "logits mismatch"
    assert jnp.array_equal(output, ref_output), "argmax mismatch"
    print("KERNEL_OK")
</pallas_src>

<mosaic_0001>
module attributes {stable_mosaic.version = 11 : i64} {
  func.func @transformer_kernel(%arg0: memref<9x32xf32, #tpu.memory_space<vmem>>, %arg1: memref<512x128xf32, #tpu.memory_space<vmem>>, %arg2: memref<2x128xf32, #tpu.memory_space<vmem>>, %arg3: memref<2x16xf32, #tpu.memory_space<vmem>>) attributes {dimension_semantics = [], scalar_prefetch = 0 : i64, scratch_operands = 1 : i64, tpu.core_type = #tpu.core_type<tc>} {
    %c448 = arith.constant 448 : index
    %c0 = arith.constant 0 : index
    %0 = vector.load %arg1[%c448, %c0] : memref<512x128xf32, #tpu.memory_space<vmem>>, vector<32x32xf32>
    %c480 = arith.constant 480 : index
    %c0_0 = arith.constant 0 : index
    %1 = vector.load %arg1[%c480, %c0_0] : memref<512x128xf32, #tpu.memory_space<vmem>>, vector<32x32xf32>
    %c0_1 = arith.constant 0 : index
    %c0_2 = arith.constant 0 : index
    %2 = vector.load %arg1[%c0_1, %c0_2] : memref<512x128xf32, #tpu.memory_space<vmem>>, vector<32x9xf32>
    %c0_3 = arith.constant 0 : index
    %c0_4 = arith.constant 0 : index
    %3 = vector.load %arg0[%c0_3, %c0_4] : memref<9x32xf32, #tpu.memory_space<vmem>>, vector<9x32xf32>
    %cst = arith.constant dense<0.000000e+00> : vector<32x32xf32>
    %4 = tpu.matmul %2, %3, %cst {dimension_numbers = #tpu.dot_dimension_numbers<[1], [0], [0], [1], [0, 0, 1, 1], [], []>} : vector<32x9xf32>, vector<9x32xf32>, vector<32x32xf32> -> vector<32x32xf32>
    %cst_5 = arith.constant 0.000000e+00 : f32
    %5 = vector.broadcast %cst_5 : f32 to vector<32x32xf32>
    %6 = arith.maximumf %4, %5 : vector<32x32xf32>
    %c32 = arith.constant 32 : index
    %c0_6 = arith.constant 0 : index
    %7 = vector.load %arg1[%c32, %c0_6] : memref<512x128xf32, #tpu.memory_space<vmem>>, vector<96x32xf32>
    %cst_7 = arith.constant dense<0.000000e+00> : vector<96x32xf32>
    %8 = tpu.matmul %7, %6, %cst_7 {dimension_numbers = #tpu.dot_dimension_numbers<[1], [0], [0], [1], [0, 0, 1, 1], [], []>} : vector<96x32xf32>, vector<32x32xf32>, vector<96x32xf32> -> vector<96x32xf32>
    %9 = vector.extract_strided_slice %8 {offsets = [0, 0], sizes = [32, 32], strides = [1, 1]} : vector<96x32xf32> to vector<32x32xf32>
    %10 = vector.extract_strided_slice %8 {offsets = [32, 0], sizes = [32, 32], strides = [1, 1]} : vector<96x32xf32> to vector<32x32xf32>
    %11 = vector.extract_strided_slice %8 {offsets = [64, 0], sizes = [32, 32], strides = [1, 1]} : vector<96x32xf32> to vector<32x32xf32>
    %12 = tpu.transpose %9, [1, 0] : vector<32x32xf32> -> vector<32x32xf32>
    %c128 = arith.constant 128 : index
    %c0_8 = arith.constant 0 : index
    %13 = vector.load %arg1[%c128, %c0_8] : memref<512x128xf32, #tpu.memory_space<vmem>>, vector<32x32xf32>
    %14 = vector.extract_strided_slice %12 {offsets = [0, 0], sizes = [32, 16], strides = [1, 1]} : vector<32x32xf32> to vector<32x16xf32>
    %15 = vector.extract_strided_slice %10 {offsets = [0, 0], sizes = [16, 32], strides = [1, 1]} : vector<32x32xf32> to vector<16x32xf32>
    %16 = vector.extract_strided_slice %11 {offsets = [0, 0], sizes = [16, 32], strides = [1, 1]} : vector<32x32xf32> to vector<16x32xf32>
    %cst_9 = arith.constant dense<0.000000e+00> : vector<32x32xf32>
    %17 = tpu.matmul %14, %15, %cst_9 {dimension_numbers = #tpu.dot_dimension_numbers<[1], [0], [0], [1], [0, 0, 1, 1], [], []>} : vector<32x16xf32>, vector<16x32xf32>, vector<32x32xf32> -> vector<32x32xf32>
    %cst_10 = arith.constant 2.500000e-01 : f32
    %18 = vector.broadcast %cst_10 : f32 to vector<32x32xf32>
    %19 = arith.mulf %17, %18 : vector<32x32xf32>
    %20 = arith.addf %19, %0 : vector<32x32xf32>
    %cst_11 = arith.constant dense<0xFF800000> : vector<32xf32>
    %21 = vector.multi_reduction <maximumf>, %20, %cst_11 [1] : vector<32x32xf32> to vector<32xf32>
    %22 = vector.shape_cast %21 : vector<32xf32> to vector<32x1xf32>
    %23 = vector.broadcast %22 : vector<32x1xf32> to vector<32x32xf32>
    %24 = arith.subf %20, %23 : vector<32x32xf32>
    %25 = math.exp %24 : vector<32x32xf32>
    %26 = arith.mulf %25, %1 : vector<32x32xf32>
    %cst_12 = arith.constant dense<0.000000e+00> : vector<32xf32>
    %27 = vector.multi_reduction <add>, %26, %cst_12 [1] : vector<32x32xf32> to vector<32xf32>
    %28 = vector.shape_cast %27 : vector<32xf32> to vector<32x1xf32>
    %29 = tpu.reciprocal %28 {approx = true} : vector<32x1xf32> -> vector<32x1xf32>
    %30 = vector.broadcast %29 : vector<32x1xf32> to vector<32x32xf32>
    %31 = arith.mulf %26, %30 : vector<32x32xf32>
    %cst_13 = arith.constant dense<0.000000e+00> : vector<16x32xf32>
    %32 = tpu.matmul %16, %31, %cst_13 {dimension_numbers = #tpu.dot_dimension_numbers<[1], [0], [0], [1], [0, 0, 1, 1], [], []>} : vector<16x32xf32>, vector<32x32xf32>, vector<16x32xf32> -> vector<16x32xf32>
    %33 = vector.extract_strided_slice %13 {offsets = [0, 0], sizes = [32, 16], strides = [1, 1]} : vector<32x32xf32> to vector<32x16xf32>
    %cst_14 = arith.constant dense<0.000000e+00> : vector<32x32xf32>
    %34 = tpu.matmul %33, %32, %cst_14 {dimension_numbers = #tpu.dot_dimension_numbers<[1], [0], [0], [1], [0, 0, 1, 1], [], []>} : vector<32x16xf32>, vector<16x32xf32>, vector<32x32xf32> -> vector<32x32xf32>
    %35 = arith.addf %6, %34 : vector<32x32xf32>
    %36 = vector.extract_strided_slice %12 {offsets = [0, 16], sizes = [32, 16], strides = [1, 1]} : vector<32x32xf32> to vector<32x16xf32>
    %37 = vector.extract_strided_slice %10 {offsets = [16, 0], sizes = [16, 32], strides = [1, 1]} : vector<32x32xf32> to vector<16x32xf32>
    %38 = vector.extract_strided_slice %11 {offsets = [16, 0], sizes = [16, 32], strides = [1, 1]} : vector<32x32xf32> to vector<16x32xf32>
    %cst_15 = arith.constant dense<0.000000e+00> : vector<32x32xf32>
    %39 = tpu.matmul %36, %37, %cst_15 {dimension_numbers = #tpu.dot_dimension_numbers<[1], [0], [0], [1], [0, 0, 1, 1], [], []>} : vector<32x16xf32>, vector<16x32xf32>, vector<32x32xf32> -> vector<32x32xf32>
    %cst_16 = arith.constant 2.500000e-01 : f32
    %40 = vector.broadcast %cst_16 : f32 to vector<32x32xf32>
    %41 = arith.mulf %39, %40 : vector<32x32xf32>
    %42 = arith.addf %41, %0 : vector<32x32xf32>
    %cst_17 = arith.constant dense<0xFF800000> : vector<32xf32>
    %43 = vector.multi_reduction <maximumf>, %42, %cst_17 [1] : vector<32x32xf32> to vector<32xf32>
    %44 = vector.shape_cast %43 : vector<32xf32> to vector<32x1xf32>
    %45 = vector.broadcast %44 : vector<32x1xf32> to vector<32x32xf32>
    %46 = arith.subf %42, %45 : vector<32x32xf32>
    %47 = math.exp %46 : vector<32x32xf32>
    %48 = arith.mulf %47, %1 : vector<32x32xf32>
    %cst_18 = arith.constant dense<0.000000e+00> : vector<32xf32>
    %49 = vector.multi_reduction <add>, %48, %cst_18 [1] : vector<32x32xf32> to vector<32xf32>
    %50 = vector.shape_cast %49 : vector<32xf32> to vector<32x1xf32>
    %51 = tpu.reciprocal %50 {approx = true} : vector<32x1xf32> -> vector<32x1xf32>
    %52 = vector.broadcast %51 : vector<32x1xf32> to vector<32x32xf32>
    %53 = arith.mulf %48, %52 : vector<32x32xf32>
    %cst_19 = arith.constant dense<0.000000e+00> : vector<16x32xf32>
    %54 = tpu.matmul %38, %53, %cst_19 {dimension_numbers = #tpu.dot_dimension_numbers<[1], [0], [0], [1], [0, 0, 1, 1], [], []>} : vector<16x32xf32>, vector<32x32xf32>, vector<16x32xf32> -> vector<16x32xf32>
    %55 = vector.extract_strided_slice %13 {offsets = [0, 16], sizes = [32, 16], strides = [1, 1]} : vector<32x32xf32> to vector<32x16xf32>
    %cst_20 = arith.constant dense<0.000000e+00> : vector<32x32xf32>
    %56 = tpu.matmul %55, %54, %cst_20 {dimension_numbers = #tpu.dot_dimension_numbers<[1], [0], [0], [1], [0, 0, 1, 1], [], []>} : vector<32x16xf32>, vector<16x32xf32>, vector<32x32xf32> -> vector<32x32xf32>
    %57 = arith.addf %35, %56 : vector<32x32xf32>
    %c160 = arith.constant 160 : index
    %c0_21 = arith.constant 0 : index
    %58 = vector.load %arg1[%c160, %c0_21] : memref<512x128xf32, #tpu.memory_space<vmem>>, vector<32x33xf32>
    %c192 = arith.constant 192 : index
    %c0_22 = arith.constant 0 : index
    %59 = vector.load %arg1[%c192, %c0_22] : memref<512x128xf32, #tpu.memory_space<vmem>>, vector<32x33xf32>
    %60 = vector.extract_strided_slice %58 {offsets = [0, 0], sizes = [32, 32], strides = [1, 1]} : vector<32x33xf32> to vector<32x32xf32>
    %cst_23 = arith.constant dense<0.000000e+00> : vector<32x32xf32>
    %61 = tpu.matmul %60, %57, %cst_23 {dimension_numbers = #tpu.dot_dimension_numbers<[1], [0], [0], [1], [0, 0, 1, 1], [], []>} : vector<32x32xf32>, vector<32x32xf32>, vector<32x32xf32> -> vector<32x32xf32>
    %62 = vector.extract_strided_slice %58 {offsets = [0, 32], sizes = [32, 1], strides = [1, 1]} : vector<32x33xf32> to vector<32x1xf32>
    %63 = vector.broadcast %62 : vector<32x1xf32> to vector<32x32xf32>
    %64 = arith.addf %61, %63 : vector<32x32xf32>
    %cst_24 = arith.constant 0.000000e+00 : f32
    %65 = vector.broadcast %cst_24 : f32 to vector<32x32xf32>
    %66 = arith.maximumf %64, %65 : vector<32x32xf32>
    %67 = vector.extract_strided_slice %59 {offsets = [0, 0], sizes = [32, 32], strides = [1, 1]} : vector<32x33xf32> to vector<32x32xf32>
    %cst_25 = arith.constant dense<0.000000e+00> : vector<32x32xf32>
    %68 = tpu.matmul %67, %66, %cst_25 {dimension_numbers = #tpu.dot_dimension_numbers<[1], [0], [0], [1], [0, 0, 1, 1], [], []>} : vector<32x32xf32>, vector<32x32xf32>, vector<32x32xf32> -> vector<32x32xf32>
    %69 = arith.addf %57, %68 : vector<32x32xf32>
    %70 = vector.extract_strided_slice %59 {offsets = [0, 32], sizes = [32, 1], strides = [1, 1]} : vector<32x33xf32> to vector<32x1xf32>
    %71 = vector.broadcast %70 : vector<32x1xf32> to vector<32x32xf32>
    %72 = arith.addf %69, %71 : vector<32x32xf32>
    %c224 = arith.constant 224 : index
    %c0_26 = arith.constant 0 : index
    %73 = vector.load %arg1[%c224, %c0_26] : memref<512x128xf32, #tpu.memory_space<vmem>>, vector<96x32xf32>
    %cst_27 = arith.constant dense<0.000000e+00> : vector<96x32xf32>
    %74 = tpu.matmul %73, %72, %cst_27 {dimension_numbers = #tpu.dot_dimension_numbers<[1], [0], [0], [1], [0, 0, 1, 1], [], []>} : vector<96x32xf32>, vector<32x32xf32>, vector<96x32xf32> -> vector<96x32xf32>
    %75 = vector.extract_strided_slice %74 {offsets = [0, 0], sizes = [32, 32], strides = [1, 1]} : vector<96x32xf32> to vector<32x32xf32>
    %76 = vector.extract_strided_slice %74 {offsets = [32, 0], sizes = [32, 32], strides = [1, 1]} : vector<96x32xf32> to vector<32x32xf32>
    %77 = vector.extract_strided_slice %74 {offsets = [64, 0], sizes = [32, 32], strides = [1, 1]} : vector<96x32xf32> to vector<32x32xf32>
    %78 = tpu.transpose %75, [1, 0] : vector<32x32xf32> -> vector<32x32xf32>
    %c320 = arith.constant 320 : index
    %c0_28 = arith.constant 0 : index
    %79 = vector.load %arg1[%c320, %c0_28] : memref<512x128xf32, #tpu.memory_space<vmem>>, vector<32x32xf32>
    %80 = vector.extract_strided_slice %78 {offsets = [0, 0], sizes = [32, 16], strides = [1, 1]} : vector<32x32xf32> to vector<32x16xf32>
    %81 = vector.extract_strided_slice %76 {offsets = [0, 0], sizes = [16, 32], strides = [1, 1]} : vector<32x32xf32> to vector<16x32xf32>
    %82 = vector.extract_strided_slice %77 {offsets = [0, 0], sizes = [16, 32], strides = [1, 1]} : vector<32x32xf32> to vector<16x32xf32>
    %cst_29 = arith.constant dense<0.000000e+00> : vector<32x32xf32>
    %83 = tpu.matmul %80, %81, %cst_29 {dimension_numbers = #tpu.dot_dimension_numbers<[1], [0], [0], [1], [0, 0, 1, 1], [], []>} : vector<32x16xf32>, vector<16x32xf32>, vector<32x32xf32> -> vector<32x32xf32>
    %cst_30 = arith.constant 2.500000e-01 : f32
    %84 = vector.broadcast %cst_30 : f32 to vector<32x32xf32>
    %85 = arith.mulf %83, %84 : vector<32x32xf32>
    %86 = arith.addf %85, %0 : vector<32x32xf32>
    %cst_31 = arith.constant dense<0xFF800000> : vector<32xf32>
    %87 = vector.multi_reduction <maximumf>, %86, %cst_31 [1] : vector<32x32xf32> to vector<32xf32>
    %88 = vector.shape_cast %87 : vector<32xf32> to vector<32x1xf32>
    %89 = vector.broadcast %88 : vector<32x1xf32> to vector<32x32xf32>
    %90 = arith.subf %86, %89 : vector<32x32xf32>
    %91 = math.exp %90 : vector<32x32xf32>
    %92 = arith.mulf %91, %1 : vector<32x32xf32>
    %cst_32 = arith.constant dense<0.000000e+00> : vector<32xf32>
    %93 = vector.multi_reduction <add>, %92, %cst_32 [1] : vector<32x32xf32> to vector<32xf32>
    %94 = vector.shape_cast %93 : vector<32xf32> to vector<32x1xf32>
    %95 = tpu.reciprocal %94 {approx = true} : vector<32x1xf32> -> vector<32x1xf32>
    %96 = vector.broadcast %95 : vector<32x1xf32> to vector<32x32xf32>
    %97 = arith.mulf %92, %96 : vector<32x32xf32>
    %cst_33 = arith.constant dense<0.000000e+00> : vector<16x32xf32>
    %98 = tpu.matmul %82, %97, %cst_33 {dimension_numbers = #tpu.dot_dimension_numbers<[1], [0], [0], [1], [0, 0, 1, 1], [], []>} : vector<16x32xf32>, vector<32x32xf32>, vector<16x32xf32> -> vector<16x32xf32>
    %99 = vector.extract_strided_slice %79 {offsets = [0, 0], sizes = [32, 16], strides = [1, 1]} : vector<32x32xf32> to vector<32x16xf32>
    %cst_34 = arith.constant dense<0.000000e+00> : vector<32x32xf32>
    %100 = tpu.matmul %99, %98, %cst_34 {dimension_numbers = #tpu.dot_dimension_numbers<[1], [0], [0], [1], [0, 0, 1, 1], [], []>} : vector<32x16xf32>, vector<16x32xf32>, vector<32x32xf32> -> vector<32x32xf32>
    %101 = arith.addf %72, %100 : vector<32x32xf32>
    %102 = vector.extract_strided_slice %78 {offsets = [0, 16], sizes = [32, 16], strides = [1, 1]} : vector<32x32xf32> to vector<32x16xf32>
    %103 = vector.extract_strided_slice %76 {offsets = [16, 0], sizes = [16, 32], strides = [1, 1]} : vector<32x32xf32> to vector<16x32xf32>
    %104 = vector.extract_strided_slice %77 {offsets = [16, 0], sizes = [16, 32], strides = [1, 1]} : vector<32x32xf32> to vector<16x32xf32>
    %cst_35 = arith.constant dense<0.000000e+00> : vector<32x32xf32>
    %105 = tpu.matmul %102, %103, %cst_35 {dimension_numbers = #tpu.dot_dimension_numbers<[1], [0], [0], [1], [0, 0, 1, 1], [], []>} : vector<32x16xf32>, vector<16x32xf32>, vector<32x32xf32> -> vector<32x32xf32>
    %cst_36 = arith.constant 2.500000e-01 : f32
    %106 = vector.broadcast %cst_36 : f32 to vector<32x32xf32>
    %107 = arith.mulf %105, %106 : vector<32x32xf32>
    %108 = arith.addf %107, %0 : vector<32x32xf32>
    %cst_37 = arith.constant dense<0xFF800000> : vector<32xf32>
    %109 = vector.multi_reduction <maximumf>, %108, %cst_37 [1] : vector<32x32xf32> to vector<32xf32>
    %110 = vector.shape_cast %109 : vector<32xf32> to vector<32x1xf32>
    %111 = vector.broadcast %110 : vector<32x1xf32> to vector<32x32xf32>
    %112 = arith.subf %108, %111 : vector<32x32xf32>
    %113 = math.exp %112 : vector<32x32xf32>
    %114 = arith.mulf %113, %1 : vector<32x32xf32>
    %cst_38 = arith.constant dense<0.000000e+00> : vector<32xf32>
    %115 = vector.multi_reduction <add>, %114, %cst_38 [1] : vector<32x32xf32> to vector<32xf32>
    %116 = vector.shape_cast %115 : vector<32xf32> to vector<32x1xf32>
    %117 = tpu.reciprocal %116 {approx = true} : vector<32x1xf32> -> vector<32x1xf32>
    %118 = vector.broadcast %117 : vector<32x1xf32> to vector<32x32xf32>
    %119 = arith.mulf %114, %118 : vector<32x32xf32>
    %cst_39 = arith.constant dense<0.000000e+00> : vector<16x32xf32>
    %120 = tpu.matmul %104, %119, %cst_39 {dimension_numbers = #tpu.dot_dimension_numbers<[1], [0], [0], [1], [0, 0, 1, 1], [], []>} : vector<16x32xf32>, vector<32x32xf32>, vector<16x32xf32> -> vector<16x32xf32>
    %121 = vector.extract_strided_slice %79 {offsets = [0, 16], sizes = [32, 16], strides = [1, 1]} : vector<32x32xf32> to vector<32x16xf32>
    %cst_40 = arith.constant dense<0.000000e+00> : vector<32x32xf32>
    %122 = tpu.matmul %121, %120, %cst_40 {dimension_numbers = #tpu.dot_dimension_numbers<[1], [0], [0], [1], [0, 0, 1, 1], [], []>} : vector<32x16xf32>, vector<16x32xf32>, vector<32x32xf32> -> vector<32x32xf32>
    %123 = arith.addf %101, %122 : vector<32x32xf32>
    %c352 = arith.constant 352 : index
    %c0_41 = arith.constant 0 : index
    %124 = vector.load %arg1[%c352, %c0_41] : memref<512x128xf32, #tpu.memory_space<vmem>>, vector<32x33xf32>
    %c384 = arith.constant 384 : index
    %c0_42 = arith.constant 0 : index
    %125 = vector.load %arg1[%c384, %c0_42] : memref<512x128xf32, #tpu.memory_space<vmem>>, vector<32x33xf32>
    %126 = vector.extract_strided_slice %124 {offsets = [0, 0], sizes = [32, 32], strides = [1, 1]} : vector<32x33xf32> to vector<32x32xf32>
    %cst_43 = arith.constant dense<0.000000e+00> : vector<32x32xf32>
    %127 = tpu.matmul %126, %123, %cst_43 {dimension_numbers = #tpu.dot_dimension_numbers<[1], [0], [0], [1], [0, 0, 1, 1], [], []>} : vector<32x32xf32>, vector<32x32xf32>, vector<32x32xf32> -> vector<32x32xf32>
    %128 = vector.extract_strided_slice %124 {offsets = [0, 32], sizes = [32, 1], strides = [1, 1]} : vector<32x33xf32> to vector<32x1xf32>
    %129 = vector.broadcast %128 : vector<32x1xf32> to vector<32x32xf32>
    %130 = arith.addf %127, %129 : vector<32x32xf32>
    %cst_44 = arith.constant 0.000000e+00 : f32
    %131 = vector.broadcast %cst_44 : f32 to vector<32x32xf32>
    %132 = arith.maximumf %130, %131 : vector<32x32xf32>
    %133 = vector.extract_strided_slice %125 {offsets = [0, 0], sizes = [32, 32], strides = [1, 1]} : vector<32x33xf32> to vector<32x32xf32>
    %cst_45 = arith.constant dense<0.000000e+00> : vector<32x32xf32>
    %134 = tpu.matmul %133, %132, %cst_45 {dimension_numbers = #tpu.dot_dimension_numbers<[1], [0], [0], [1], [0, 0, 1, 1], [], []>} : vector<32x32xf32>, vector<32x32xf32>, vector<32x32xf32> -> vector<32x32xf32>
    %135 = arith.addf %123, %134 : vector<32x32xf32>
    %136 = vector.extract_strided_slice %125 {offsets = [0, 32], sizes = [32, 1], strides = [1, 1]} : vector<32x33xf32> to vector<32x1xf32>
    %137 = vector.broadcast %136 : vector<32x1xf32> to vector<32x32xf32>
    %138 = arith.addf %135, %137 : vector<32x32xf32>
    %c416 = arith.constant 416 : index
    %c0_46 = arith.constant 0 : index
    %139 = vector.load %arg1[%c416, %c0_46] : memref<512x128xf32, #tpu.memory_space<vmem>>, vector<1x33xf32>
    %140 = vector.extract_strided_slice %139 {offsets = [0, 0], sizes = [1, 32], strides = [1, 1]} : vector<1x33xf32> to vector<1x32xf32>
    %cst_47 = arith.constant dense<0.000000e+00> : vector<1x32xf32>
    %141 = tpu.matmul %140, %138, %cst_47 {dimension_numbers = #tpu.dot_dimension_numbers<[1], [0], [0], [1], [0, 0, 1, 1], [], []>} : vector<1x32xf32>, vector<32x32xf32>, vector<1x32xf32> -> vector<1x32xf32>
    %142 = vector.extract_strided_slice %139 {offsets = [0, 32], sizes = [1, 1], strides = [1, 1]} : vector<1x33xf32> to vector<1x1xf32>
    %143 = vector.broadcast %142 : vector<1x1xf32> to vector<1x32xf32>
    %144 = arith.addf %141, %143 : vector<1x32xf32>
    %145 = vector.extract_strided_slice %144 {offsets = [0, 0], sizes = [1, 16], strides = [1, 1]} : vector<1x32xf32> to vector<1x16xf32>
    %c0_48 = arith.constant 0 : index
    %c0_49 = arith.constant 0 : index
    %146 = vector.load %arg3[%c0_48, %c0_49] : memref<2x16xf32, #tpu.memory_space<vmem>>, vector<1x16xf32>
    tpu.vector_store %arg3[%c0_48, %c0_49], %145 {strides = array<i32>} : memref<2x16xf32, #tpu.memory_space<vmem>>, vector<1x16xf32>,
    %147 = vector.extract_strided_slice %144 {offsets = [0, 16], sizes = [1, 16], strides = [1, 1]} : vector<1x32xf32> to vector<1x16xf32>
    %c1 = arith.constant 1 : index
    %c0_50 = arith.constant 0 : index
    %148 = vector.load %arg3[%c1, %c0_50] : memref<2x16xf32, #tpu.memory_space<vmem>>, vector<1x16xf32>
    tpu.vector_store %arg3[%c1, %c0_50], %147 {strides = array<i32>} : memref<2x16xf32, #tpu.memory_space<vmem>>, vector<1x16xf32>,
    %c424 = arith.constant 424 : index
    %c0_51 = arith.constant 0 : index
    %149 = vector.load %arg1[%c424, %c0_51] : memref<512x128xf32, #tpu.memory_space<vmem>>, vector<16x128xf32>
    %c440 = arith.constant 440 : index
    %c0_52 = arith.constant 0 : index
    %150 = vector.load %arg1[%c440, %c0_52] : memref<512x128xf32, #tpu.memory_space<vmem>>, vector<1x128xf32>
    %c0_53 = arith.constant 0 : index
    %c0_54 = arith.constant 0 : index
    %151 = vector.load %arg3[%c0_53, %c0_54] : memref<2x16xf32, #tpu.memory_space<vmem>>, vector<2x16xf32>
    %cst_55 = arith.constant dense<0.000000e+00> : vector<2x128xf32>
    %152 = tpu.matmul %151, %149, %cst_55 {dimension_numbers = #tpu.dot_dimension_numbers<[1], [0], [0], [1], [0, 0, 1, 1], [], []>} : vector<2x16xf32>, vector<16x128xf32>, vector<2x128xf32> -> vector<2x128xf32>
    %153 = vector.broadcast %150 : vector<1x128xf32> to vector<2x128xf32>
    %154 = arith.addf %152, %153 : vector<2x128xf32>
    %c0_56 = arith.constant 0 : index
    %c0_57 = arith.constant 0 : index
    %155 = vector.load %arg2[%c0_56, %c0_57] : memref<2x128xf32, #tpu.memory_space<vmem>>, vector<2x128xf32>
    tpu.vector_store %arg2[%c0_56, %c0_57], %154 {strides = array<i32>} : memref<2x128xf32, #tpu.memory_space<vmem>>, vector<2x128xf32>,
    return
  }
}

</mosaic_0001>

<llo_original>
// kernel: transformer_forward.1
$region0: #{transformer_forward.1}
  #allocation0 [shape = 'u32[]', space=smem, size = 0x4, offset = 0x4, fixed_abs, tag = 'smem constant byte address 0x4 - core index']
  #allocation1 [shape = 'u32[144,128]{1,0:T(1,128)}', space=vmem, size = 0x12000, scoped, tag = 'internal scratch']
  #allocation2 [shape = 'f32[2,16]{1,0:T(2,128)}', space=vmem, size = 0x400, scoped, tag = 'scratch operand']
  %s0 = inlined_call_operand.vmem [shape: f32[9,32], index: 0, kind: input, shape index: {}]
  %s1 = inlined_call_operand.hbm [shape: f32[512,128], index: 1, kind: input, shape index: {}]
  %s2 = inlined_call_operand.vmem [shape: f32[2,128], index: 2, kind: output, shape index: {}]
  %s3 = sld [smem:[#allocation0]]
  $region22: #{transformer_forward.1} parent=0
    _
  %s5 = ssub.s32 1, %s3
  %s6 = scalar_select 0, %s5, %s3
  $region1: #{transformer_forward.1} parent=0
    #allocation3 [shape = 'u8[262144]{0}', space=vmem, size = 0x40000, scoped, tag = 'input window, operand 1, single buffered']
    #allocation4 [shape = 's32[1]{0}', space=sflag, size = 0x4, scoped, tag = 'scoped memory for transformer_forward.1']
    %7 = vsyncpa [#allocation4], 0
    // Predicated region
    $region2: #{transformer_forward.1} parent=1 // pred_check
      _
    $region3: #{transformer_forward.1} parent=1 // pred_check_branch
      %9 = sbr.rel (0) target = $region5
    $region4: #{transformer_forward.1} parent=1 // pred_region
      _
    $region5: #{transformer_forward.1} parent=1 // pred_fallthru
      _
    // Predicated region
    $region6: #{transformer_forward.1} parent=1 // pred_check
      _
    $region7: #{transformer_forward.1} parent=1 // pred_check_branch
      %11 = sbr.rel (0) target = $region9
    $region8: #{transformer_forward.1} parent=1 // pred_region
      %s13 = ssub.s32 8192, 8192
      %14 = vsyncadd [#allocation4], %s13
      %s15 = sshll.u32 [#allocation3], 4
      %s16 = int_to_ptr.vmem [resolvable:$true] %s15
      %21 = dma.hbm_to_vmem [thread:$0]  %s1, 8192, %s16, [#allocation4], 128, 128, 8
    $region9: #{transformer_forward.1} parent=1 // pred_fallthru
      _
    // Predicated region
    $region10: #{transformer_forward.1} parent=1 // pred_check
      _
    $region11: #{transformer_forward.1} parent=1 // pred_check_branch
      %23 = sbr.rel (0) target = $region13
    $region12: #{transformer_forward.1} parent=1 // pred_region
      %24 = dma.done [#allocation4], 8192
    $region13: #{transformer_forward.1} parent=1 // pred_fallthru
      _
    %v25 = vld [vmem:[#allocation3 + $0x1c0] sm:$0xff]
    %v26 = vld [vmem:[#allocation3 + $0x1c8] sm:$0xff]
    %v27 = vld [vmem:[#allocation3 + $0x1d0] sm:$0xff]
    %v28 = vld [vmem:[#allocation3 + $0x1d8] sm:$0xff]
    %v29 = vld [vmem:[#allocation3 + $0x1e0] sm:$0xff]
    %v30 = vld [vmem:[#allocation3 + $0x1e8] sm:$0xff]
    %v31 = vld [vmem:[#allocation3 + $0x1f0] sm:$0xff]
    %v32 = vld [vmem:[#allocation3 + $0x1f8] sm:$0xff]
    %v33 = vld [vmem:[#allocation3] sm:$0xff]
    %v34 = vld [vmem:[#allocation3 + $0x8] sm:$0xff]
    %v35 = vld [vmem:[#allocation3 + $0x10] sm:$0xff]
    %v36 = vld [vmem:[#allocation3 + $0x18] sm:$0xff]
    %v37 = vld [vmem:[%s0] sm:$0xff]
    %v38 = vld [vmem:[%s0 + $0x8] sm:$0x1]
    %vm39 = vcmask 72704
    %v41 = vsel %vm39, %v33, 0
    %v44 = vsel %vm39, %v34, 0
    %v47 = vsel %vm39, %v35, 0
    %v50 = vsel %vm39, %v36, 0
    %vm52 = vcmask 1040384
    %v54 = vsel %vm52, %v38, 0
    %56 = vmatprep.subr.mxu0 0.0
    %57 = vmatpush1.msra.mxu0 0.0
    %58 = vmatprep.subr.mxu0 0.0
    %59 = vmatpush1.msra.mxu0 0.0
    %60 = vmatprep.subr.mxu0 0.0
    %61 = vmatpush1.msra.mxu0 0.0
    %62 = vmatprep.subr.mxu0 0.0
    %63 = vmatpush1.msra.mxu0 0.0
    %64 = vmatprep.subr.mxu0 0.0
    %65 = vmatpush1.msra.mxu0 0.0
    %66 = vmatprep.subr.mxu0 0.0
    %67 = vmatpush1.msra.mxu0 0.0
    %68 = vmatprep.subr.mxu0 0.0
    %69 = vmatpush1.msra.mxu0 0.0
    %70 = vmatprep.subr.mxu0 0.0
    %71 = vmatpush1.msra.mxu0 0.0
    %72 = vmatprep.subr.mxu0 0.0
    %73 = vmatpush1.msra.mxu0 0.0
    %74 = vmatprep.subr.mxu0 0.0
    %75 = vmatpush1.msra.mxu0 0.0
    %76 = vmatprep.subr.mxu0 0.0
    %77 = vmatpush1.msra.mxu0 0.0
    %78 = vmatprep.subr.mxu0 0.0
    %79 = vmatpush1.msra.mxu0 0.0
    %80 = vmatprep.subr.mxu0 0.0
    %81 = vmatpush1.msra.mxu0 0.0
    %82 = vmatprep.subr.mxu0 0.0
    %83 = vmatpush1.msra.mxu0 0.0
    %84 = vmatprep.subr.mxu0 0.0
    %85 = vmatpush1.msra.mxu0 %v54
    %86 = vmatprep.subr.mxu0 0.0
    %87 = vmatpush1.msra.mxu0 %v37
    %88 = vmatprep.subr.mxu0 0.0
    %89 = vmatpush2.msra.mxu0 0.0
    %90 = vmatprep.subr.mxu0 0.0
    %91 = vmatpush2.msra.mxu0 0.0
    %92 = vmatprep.subr.mxu0 0.0
    %93 = vmatpush2.msra.mxu0 0.0
    %94 = vmatprep.subr.mxu0 0.0
    %95 = vmatpush2.msra.mxu0 0.0
    %96 = vmatprep.subr.mxu0 0.0
    %97 = vmatpush2.msra.mxu0 0.0
    %98 = vmatprep.subr.mxu0 0.0
    %99 = vmatpush2.msra.mxu0 0.0
    %100 = vmatprep.subr.mxu0 0.0
    %101 = vmatpush2.msra.mxu0 0.0
    %102 = vmatprep.subr.mxu0 0.0
    %103 = vmatpush2.msra.mxu0 0.0
    %104 = vmatprep.subr.mxu0 0.0
    %105 = vmatpush2.msra.mxu0 0.0
    %106 = vmatprep.subr.mxu0 0.0
    %107 = vmatpush2.msra.mxu0 0.0
    %108 = vmatprep.subr.mxu0 0.0
    %109 = vmatpush2.msra.mxu0 0.0
    %110 = vmatprep.subr.mxu0 0.0
    %111 = vmatpush2.msra.mxu0 0.0
    %112 = vmatprep.subr.mxu0 0.0
    %113 = vmatpush2.msra.mxu0 0.0
    %114 = vmatprep.subr.mxu0 0.0
    %115 = vmatpush2.msra.mxu0 0.0
    %116 = vmatprep.subr.mxu0 0.0
    %117 = vmatpush2.msra.mxu0 0.0
    %118 = vmatprep.subr.mxu0 0.0
    %119 = vmatpush2.msra.mxu0 0.0
    %120 = vmatprep.mubr.f32.mxu0 0.0
    %121 = vmatmul.mubr.f32.gmra.mxu0 %v41
    %v122 = vpop.f32.mrf.mxu0
    %v123 = vadd.f32 0.0, %v122
    %v124 = vpop.f32.mrf.mxu0
    %125 = vmatprep.mubr.f32.mxu0 0.0
    %126 = vmatmul.mubr.f32.gmra.mxu0 %v44
    %v127 = vpop.f32.mrf.mxu0
    %v128 = vadd.f32 0.0, %v127
    %v129 = vpop.f32.mrf.mxu0
    %130 = vmatprep.mubr.f32.mxu0 0.0
    %131 = vmatmul.mubr.f32.gmra.mxu0 %v47
    %v132 = vpop.f32.mrf.mxu0
    %v133 = vadd.f32 0.0, %v132
    %v134 = vpop.f32.mrf.mxu0
    %135 = vmatprep.mubr.f32.mxu0 0.0
    %136 = vmatmul.mubr.f32.gmra.mxu0 %v50
    %v137 = vpop.f32.mrf.mxu0
    %v138 = vadd.f32 0.0, %v137
    %v139 = vpop.f32.mrf.mxu0
    %140 = vdwg.mxu0
    %v141 = vmax.f32 %v123, 0.0
    %v142 = vmax.f32 %v128, 0.0
    %v143 = vmax.f32 %v133, 0.0
    %v144 = vmax.f32 %v138, 0.0
    %v145 = vld [vmem:[#allocation3 + $0x20] sm:$0xff]
    %v146 = vld [vmem:[#allocation3 + $0x28] sm:$0xff]
    %v147 = vld [vmem:[#allocation3 + $0x30] sm:$0xff]
    %v148 = vld [vmem:[#allocation3 + $0x38] sm:$0xff]
    %v149 = vld [vmem:[#allocation3 + $0x40] sm:$0xff]
    %v150 = vld [vmem:[#allocation3 + $0x48] sm:$0xff]
    %v151 = vld [vmem:[#allocation3 + $0x50] sm:$0xff]
    %v152 = vld [vmem:[#allocation3 + $0x58] sm:$0xff]
    %v153 = vld [vmem:[#allocation3 + $0x60] sm:$0xff]
    %v154 = vld [vmem:[#allocation3 + $0x68] sm:$0xff]
    %v155 = vld [vmem:[#allocation3 + $0x70] sm:$0xff]
    %v156 = vld [vmem:[#allocation3 + $0x78] sm:$0xff]
    %vm157 = vcmask 261120
    %v159 = vsel %vm157, %v145, 0
    %v162 = vsel %vm157, %v146, 0
    %v165 = vsel %vm157, %v147, 0
    %v168 = vsel %vm157, %v148, 0
    %v171 = vsel %vm157, %v149, 0
    %v174 = vsel %vm157, %v150, 0
    %v177 = vsel %vm157, %v151, 0
    %v180 = vsel %vm157, %v152, 0
    %v183 = vsel %vm157, %v153, 0
    %v186 = vsel %vm157, %v154, 0
    %v189 = vsel %vm157, %v155, 0
    %v192 = vsel %vm157, %v156, 0
    %194 = vmatprep.subr.mxu0 0.0
    %195 = vmatpush1.msra.mxu0 0.0
    %196 = vmatprep.subr.mxu0 0.0
    %197 = vmatpush1.msra.mxu0 0.0
    %198 = vmatprep.subr.mxu0 0.0
    %199 = vmatpush1.msra.mxu0 0.0
    %200 = vmatprep.subr.mxu0 0.0
    %201 = vmatpush1.msra.mxu0 0.0
    %202 = vmatprep.subr.mxu0 0.0
    %203 = vmatpush1.msra.mxu0 0.0
    %204 = vmatprep.subr.mxu0 0.0
    %205 = vmatpush1.msra.mxu0 0.0
    %206 = vmatprep.subr.mxu0 0.0
    %207 = vmatpush1.msra.mxu0 0.0
    %208 = vmatprep.subr.mxu0 0.0
    %209 = vmatpush1.msra.mxu0 0.0
    %210 = vmatprep.subr.mxu0 0.0
    %211 = vmatpush1.msra.mxu0 0.0
    %212 = vmatprep.subr.mxu0 0.0
    %213 = vmatpush1.msra.mxu0 0.0
    %214 = vmatprep.subr.mxu0 0.0
    %215 = vmatpush1.msra.mxu0 0.0
    %216 = vmatprep.subr.mxu0 0.0
    %217 = vmatpush1.msra.mxu0 0.0
    %218 = vmatprep.subr.mxu0 0.0
    %219 = vmatpush1.msra.mxu0 %v144
    %220 = vmatprep.subr.mxu0 0.0
    %221 = vmatpush1.msra.mxu0 %v143
    %222 = vmatprep.subr.mxu0 0.0
    %223 = vmatpush1.msra.mxu0 %v142
    %224 = vmatprep.subr.mxu0 0.0
    %225 = vmatpush1.msra.mxu0 %v141
    %226 = vmatprep.subr.mxu0 0.0
    %227 = vmatpush2.msra.mxu0 0.0
    %228 = vmatprep.subr.mxu0 0.0
    %229 = vmatpush2.msra.mxu0 0.0
    %230 = vmatprep.subr.mxu0 0.0
    %231 = vmatpush2.msra.mxu0 0.0
    %232 = vmatprep.subr.mxu0 0.0
    %233 = vmatpush2.msra.mxu0 0.0
    %234 = vmatprep.subr.mxu0 0.0
    %235 = vmatpush2.msra.mxu0 0.0
    %236 = vmatprep.subr.mxu0 0.0
    %237 = vmatpush2.msra.mxu0 0.0
    %238 = vmatprep.subr.mxu0 0.0
    %239 = vmatpush2.msra.mxu0 0.0
    %240 = vmatprep.subr.mxu0 0.0
    %241 = vmatpush2.msra.mxu0 0.0
    %242 = vmatprep.subr.mxu0 0.0
    %243 = vmatpush2.msra.mxu0 0.0
    %244 = vmatprep.subr.mxu0 0.0
    %245 = vmatpush2.msra.mxu0 0.0
    %246 = vmatprep.subr.mxu0 0.0
    %247 = vmatpush2.msra.mxu0 0.0
    %248 = vmatprep.subr.mxu0 0.0
    %249 = vmatpush2.msra.mxu0 0.0
    %250 = vmatprep.subr.mxu0 0.0
    %251 = vmatpush2.msra.mxu0 0.0
    %252 = vmatprep.subr.mxu0 0.0
    %253 = vmatpush2.msra.mxu0 0.0
    %254 = vmatprep.subr.mxu0 0.0
    %255 = vmatpush2.msra.mxu0 0.0
    %256 = vmatprep.subr.mxu0 0.0
    %257 = vmatpush2.msra.mxu0 0.0
    %258 = vmatprep.mubr.f32.mxu0 0.0
    %259 = vmatmul.mubr.f32.gmra.mxu0 %v159
    %v260 = vpop.f32.mrf.mxu0
    %v261 = vadd.f32 0.0, %v260
    %v262 = vpop.f32.mrf.mxu0
    %263 = vmatprep.mubr.f32.mxu0 0.0
    %264 = vmatmul.mubr.f32.gmra.mxu0 %v162
    %v265 = vpop.f32.mrf.mxu0
    %v266 = vadd.f32 0.0, %v265
    %v267 = vpop.f32.mrf.mxu0
    %268 = vmatprep.mubr.f32.mxu0 0.0
    %269 = vmatmul.mubr.f32.gmra.mxu0 %v165
    %v270 = vpop.f32.mrf.mxu0
    %v271 = vadd.f32 0.0, %v270
    %v272 = vpop.f32.mrf.mxu0
    %273 = vmatprep.mubr.f32.mxu0 0.0
    %274 = vmatmul.mubr.f32.gmra.mxu0 %v168
    %v275 = vpop.f32.mrf.mxu0
    %v276 = vadd.f32 0.0, %v275
    %v277 = vpop.f32.mrf.mxu0
    %278 = vmatprep.mubr.f32.mxu0 0.0
    %279 = vmatmul.mubr.f32.gmra.mxu0 %v171
    %v280 = vpop.f32.mrf.mxu0
    %v281 = vadd.f32 0.0, %v280
    %v282 = vpop.f32.mrf.mxu0
    %283 = vmatprep.mubr.f32.mxu0 0.0
    %284 = vmatmul.mubr.f32.gmra.mxu0 %v174
    %v285 = vpop.f32.mrf.mxu0
    %v286 = vadd.f32 0.0, %v285
    %v287 = vpop.f32.mrf.mxu0
    %288 = vmatprep.mubr.f32.mxu0 0.0
    %289 = vmatmul.mubr.f32.gmra.mxu0 %v177
    %v290 = vpop.f32.mrf.mxu0
    %v291 = vadd.f32 0.0, %v290
    %v292 = vpop.f32.mrf.mxu0
    %293 = vmatprep.mubr.f32.mxu0 0.0
    %294 = vmatmul.mubr.f32.gmra.mxu0 %v180
    %v295 = vpop.f32.mrf.mxu0
    %v296 = vadd.f32 0.0, %v295
    %v297 = vpop.f32.mrf.mxu0
    %298 = vmatprep.mubr.f32.mxu0 0.0
    %299 = vmatmul.mubr.f32.gmra.mxu0 %v183
    %v300 = vpop.f32.mrf.mxu0
    %v301 = vadd.f32 0.0, %v300
    %v302 = vpop.f32.mrf.mxu0
    %303 = vmatprep.mubr.f32.mxu0 0.0
    %304 = vmatmul.mubr.f32.gmra.mxu0 %v186
    %v305 = vpop.f32.mrf.mxu0
    %v306 = vadd.f32 0.0, %v305
    %v307 = vpop.f32.mrf.mxu0
    %308 = vmatprep.mubr.f32.mxu0 0.0
    %309 = vmatmul.mubr.f32.gmra.mxu0 %v189
    %v310 = vpop.f32.mrf.mxu0
    %v311 = vadd.f32 0.0, %v310
    %v312 = vpop.f32.mrf.mxu0
    %313 = vmatprep.mubr.f32.mxu0 0.0
    %314 = vmatmul.mubr.f32.gmra.mxu0 %v192
    %v315 = vpop.f32.mrf.mxu0
    %v316 = vadd.f32 0.0, %v315
    %v317 = vpop.f32.mrf.mxu0
    %318 = vdwg.mxu0
    %319 = vxpose.xlu0.b32.start [1/16] %v261, 128
    %320 = vxpose.xlu0.b32.cont [2/16] %v266, 128
    %321 = vxpose.xlu0.b32.cont [3/16] %v271, 128
    %322 = vxpose.xlu0.b32.cont [4/16] %v276, 128
    %323 = vxpose.xlu0.b32.cont [5/16] 0.0, 128
    %324 = vxpose.xlu0.b32.cont [6/16] 0.0, 128
    %325 = vxpose.xlu0.b32.cont [7/16] 0.0, 128
    %326 = vxpose.xlu0.b32.cont [8/16] 0.0, 128
    %327 = vxpose.xlu0.b32.cont [9/16] 0.0, 128
    %328 = vxpose.xlu0.b32.cont [10/16] 0.0, 128
    %329 = vxpose.xlu0.b32.cont [11/16] 0.0, 128
    %330 = vxpose.xlu0.b32.cont [12/16] 0.0, 128
    %331 = vxpose.xlu0.b32.cont [13/16] 0.0, 128
    %332 = vxpose.xlu0.b32.cont [14/16] 0.0, 128
    %333 = vxpose.xlu0.b32.cont [15/16] 0.0, 128
    %334 = vxpose.xlu0.b32.end [16/16] 0.0, 128
    %v335 = vpop.trf.xlu0
    %v336 = vpop.trf.xlu0
    %v337 = vpop.trf.xlu0
    %v338 = vpop.trf.xlu0
    %v339 = vpop.trf.xlu0
    %v340 = vpop.trf.xlu0
    %v341 = vpop.trf.xlu0
    %v342 = vpop.trf.xlu0
    %v343 = vpop.trf.xlu0
    %v344 = vpop.trf.xlu0
    %v345 = vpop.trf.xlu0
    %v346 = vpop.trf.xlu0
    %v347 = vpop.trf.xlu0
    %v348 = vpop.trf.xlu0
    %v349 = vpop.trf.xlu0
    %v350 = vpop.trf.xlu0
    %v351 = vld [vmem:[#allocation3 + $0x80] sm:$0xff]
    %v352 = vld [vmem:[#allocation3 + $0x88] sm:$0xff]
    %v353 = vld [vmem:[#allocation3 + $0x90] sm:$0xff]
    %v354 = vld [vmem:[#allocation3 + $0x98] sm:$0xff]
    %vm355 = vcmask 130048
    %v357 = vsel %vm355, %v335, 0
    %v360 = vsel %vm355, %v336, 0
    %v363 = vsel %vm355, %v337, 0
    %v366 = vsel %vm355, %v338, 0
    %368 = vmatprep.subr.mxu0 0.0
    %369 = vmatpush1.msra.mxu0 0.0
    %370 = vmatprep.subr.mxu0 0.0
    %371 = vmatpush1.msra.mxu0 0.0
    %372 = vmatprep.subr.mxu0 0.0
    %373 = vmatpush1.msra.mxu0 0.0
    %374 = vmatprep.subr.mxu0 0.0
    %375 = vmatpush1.msra.mxu0 0.0
    %376 = vmatprep.subr.mxu0 0.0
    %377 = vmatpush1.msra.mxu0 0.0
    %378 = vmatprep.subr.mxu0 0.0
    %379 = vmatpush1.msra.mxu0 0.0
    %380 = vmatprep.subr.mxu0 0.0
    %381 = vmatpush1.msra.mxu0 0.0
    %382 = vmatprep.subr.mxu0 0.0
    %383 = vmatpush1.msra.mxu0 0.0
    %384 = vmatprep.subr.mxu0 0.0
    %385 = vmatpush1.msra.mxu0 0.0
    %386 = vmatprep.subr.mxu0 0.0
    %387 = vmatpush1.msra.mxu0 0.0
    %388 = vmatprep.subr.mxu0 0.0
    %389 = vmatpush1.msra.mxu0 0.0
    %390 = vmatprep.subr.mxu0 0.0
    %391 = vmatpush1.msra.mxu0 0.0
    %392 = vmatprep.subr.mxu0 0.0
    %393 = vmatpush1.msra.mxu0 0.0
    %394 = vmatprep.subr.mxu0 0.0
    %395 = vmatpush1.msra.mxu0 0.0
    %396 = vmatprep.subr.mxu0 0.0
    %397 = vmatpush1.msra.mxu0 %v286
    %398 = vmatprep.subr.mxu0 0.0
    %399 = vmatpush1.msra.mxu0 %v281
    %400 = vmatprep.subr.mxu0 0.0
    %401 = vmatpush2.msra.mxu0 0.0
    %402 = vmatprep.subr.mxu0 0.0
    %403 = vmatpush2.msra.mxu0 0.0
    %404 = vmatprep.subr.mxu0 0.0
    %405 = vmatpush2.msra.mxu0 0.0
    %406 = vmatprep.subr.mxu0 0.0
    %407 = vmatpush2.msra.mxu0 0.0
    %408 = vmatprep.subr.mxu0 0.0
    %409 = vmatpush2.msra.mxu0 0.0
    %410 = vmatprep.subr.mxu0 0.0
    %411 = vmatpush2.msra.mxu0 0.0
    %412 = vmatprep.subr.mxu0 0.0
    %413 = vmatpush2.msra.mxu0 0.0
    %414 = vmatprep.subr.mxu0 0.0
    %415 = vmatpush2.msra.mxu0 0.0
    %416 = vmatprep.subr.mxu0 0.0
    %417 = vmatpush2.msra.mxu0 0.0
    %418 = vmatprep.subr.mxu0 0.0
    %419 = vmatpush2.msra.mxu0 0.0
    %420 = vmatprep.subr.mxu0 0.0
    %421 = vmatpush2.msra.mxu0 0.0
    %422 = vmatprep.subr.mxu0 0.0
    %423 = vmatpush2.msra.mxu0 0.0
    %424 = vmatprep.subr.mxu0 0.0
    %425 = vmatpush2.msra.mxu0 0.0
    %426 = vmatprep.subr.mxu0 0.0
    %427 = vmatpush2.msra.mxu0 0.0
    %428 = vmatprep.subr.mxu0 0.0
    %429 = vmatpush2.msra.mxu0 0.0
    %430 = vmatprep.subr.mxu0 0.0
    %431 = vmatpush2.msra.mxu0 0.0
    %432 = vmatprep.mubr.f32.mxu0 0.0
    %433 = vmatmul.mubr.f32.gmra.mxu0 %v357
    %v434 = vpop.f32.mrf.mxu0
    %v435 = vadd.f32 0.0, %v434
    %v436 = vpop.f32.mrf.mxu0
    %437 = vmatprep.mubr.f32.mxu0 0.0
    %438 = vmatmul.mubr.f32.gmra.mxu0 %v360
    %v439 = vpop.f32.mrf.mxu0
    %v440 = vadd.f32 0.0, %v439
    %v441 = vpop.f32.mrf.mxu0
    %442 = vmatprep.mubr.f32.mxu0 0.0
    %443 = vmatmul.mubr.f32.gmra.mxu0 %v363
    %v444 = vpop.f32.mrf.mxu0
    %v445 = vadd.f32 0.0, %v444
    %v446 = vpop.f32.mrf.mxu0
    %447 = vmatprep.mubr.f32.mxu0 0.0
    %448 = vmatmul.mubr.f32.gmra.mxu0 %v366
    %v449 = vpop.f32.mrf.mxu0
    %v450 = vadd.f32 0.0, %v449
    %v451 = vpop.f32.mrf.mxu0
    %452 = vdwg.mxu0
    %v453 = vmul.f32 %v435, 0.25
    %v454 = vmul.f32 %v440, 0.25
    %v455 = vmul.f32 %v445, 0.25
    %v456 = vmul.f32 %v450, 0.25
    %v457 = vadd.f32 %v453, %v25
    %v458 = vadd.f32 %v454, %v26
    %v459 = vadd.f32 %v455, %v27
    %v460 = vadd.f32 %v456, %v28
    %v461 = vsel %vm157, %v457, -inf
    %462 = vmax.xlane.f32.xlu0 %v461
    %v463 = vpop.xlane.xlu0 %462
    %v464 = vsel %vm157, %v458, -inf
    %465 = vmax.xlane.f32.xlu0 %v464
    %v466 = vpop.xlane.xlu0 %465
    %v467 = vsel %vm157, %v459, -inf
    %468 = vmax.xlane.f32.xlu0 %v467
    %v469 = vpop.xlane.xlu0 %468
    %v470 = vsel %vm157, %v460, -inf
    %471 = vmax.xlane.f32.xlu0 %v470
    %v472 = vpop.xlane.xlu0 %471
    %v473 = vsub.f32 %v457, %v463
    %v474 = vsub.f32 %v458, %v466
    %v475 = vsub.f32 %v459, %v469
    %v476 = vsub.f32 %v460, %v472
    %v477 = vmul.f32 %v473, 1.442695
    %v478 = vpow.pop %v477
    %v479 = vmul.f32 %v474, 1.442695
    %v480 = vpow.pop %v479
    %v481 = vmul.f32 %v475, 1.442695
    %v482 = vpow.pop %v481
    %v483 = vmul.f32 %v476, 1.442695
    %v484 = vpow.pop %v483
    %v485 = vmul.f32 %v478, %v29
    %v486 = vmul.f32 %v480, %v30
    %v487 = vmul.f32 %v482, %v31
    %v488 = vmul.f32 %v484, %v32
    %v489 = vsel %vm157, %v485, 0.0
    %490 = vadd.xlane.f32.xlu0 %v489
    %v491 = vpop.xlane.xlu0 %490
    %v492 = vsel %vm157, %v486, 0.0
    %493 = vadd.xlane.f32.xlu0 %v492
    %v494 = vpop.xlane.xlu0 %493
    %v495 = vsel %vm157, %v487, 0.0
    %496 = vadd.xlane.f32.xlu0 %v495
    %v497 = vpop.xlane.xlu0 %496
    %v498 = vsel %vm157, %v488, 0.0
    %499 = vadd.xlane.f32.xlu0 %v498
    %v500 = vpop.xlane.xlu0 %499
    %v501 = vrcp.pop %v491
    %v502 = vrcp.pop %v494
    %v503 = vrcp.pop %v497
    %v504 = vrcp.pop %v500
    %v505 = vmul.f32 %v485, %v501
    %v506 = vmul.f32 %v486, %v502
    %v507 = vmul.f32 %v487, %v503
    %v508 = vmul.f32 %v488, %v504
    %v510 = vsel %vm157, %v301, 0
    %v513 = vsel %vm157, %v306, 0
    %515 = vmatprep.subr.mxu0 0.0
    %516 = vmatpush1.msra.mxu0 0.0
    %517 = vmatprep.subr.mxu0 0.0
    %518 = vmatpush1.msra.mxu0 0.0
    %519 = vmatprep.subr.mxu0 0.0
    %520 = vmatpush1.msra.mxu0 0.0
    %521 = vmatprep.subr.mxu0 0.0
    %522 = vmatpush1.msra.mxu0 0.0
    %523 = vmatprep.subr.mxu0 0.0
    %524 = vmatpush1.msra.mxu0 0.0
    %525 = vmatprep.subr.mxu0 0.0
    %526 = vmatpush1.msra.mxu0 0.0
    %527 = vmatprep.subr.mxu0 0.0
    %528 = vmatpush1.msra.mxu0 0.0
    %529 = vmatprep.subr.mxu0 0.0
    %530 = vmatpush1.msra.mxu0 0.0
    %531 = vmatprep.subr.mxu0 0.0
    %532 = vmatpush1.msra.mxu0 0.0
    %533 = vmatprep.subr.mxu0 0.0
    %534 = vmatpush1.msra.mxu0 0.0
    %535 = vmatprep.subr.mxu0 0.0
    %536 = vmatpush1.msra.mxu0 0.0
    %537 = vmatprep.subr.mxu0 0.0
    %538 = vmatpush1.msra.mxu0 0.0
    %539 = vmatprep.subr.mxu0 0.0
    %540 = vmatpush1.msra.mxu0 %v508
    %541 = vmatprep.subr.mxu0 0.0
    %542 = vmatpush1.msra.mxu0 %v507
    %543 = vmatprep.subr.mxu0 0.0
    %544 = vmatpush1.msra.mxu0 %v506
    %545 = vmatprep.subr.mxu0 0.0
    %546 = vmatpush1.msra.mxu0 %v505
    %547 = vmatprep.subr.mxu0 0.0
    %548 = vmatpush2.msra.mxu0 0.0
    %549 = vmatprep.subr.mxu0 0.0
    %550 = vmatpush2.msra.mxu0 0.0
    %551 = vmatprep.subr.mxu0 0.0
    %552 = vmatpush2.msra.mxu0 0.0
    %553 = vmatprep.subr.mxu0 0.0
    %554 = vmatpush2.msra.mxu0 0.0
    %555 = vmatprep.subr.mxu0 0.0
    %556 = vmatpush2.msra.mxu0 0.0
    %557 = vmatprep.subr.mxu0 0.0
    %558 = vmatpush2.msra.mxu0 0.0
    %559 = vmatprep.subr.mxu0 0.0
    %560 = vmatpush2.msra.mxu0 0.0
    %561 = vmatprep.subr.mxu0 0.0
    %562 = vmatpush2.msra.mxu0 0.0
    %563 = vmatprep.subr.mxu0 0.0
    %564 = vmatpush2.msra.mxu0 0.0
    %565 = vmatprep.subr.mxu0 0.0
    %566 = vmatpush2.msra.mxu0 0.0
    %567 = vmatprep.subr.mxu0 0.0
    %568 = vmatpush2.msra.mxu0 0.0
    %569 = vmatprep.subr.mxu0 0.0
    %570 = vmatpush2.msra.mxu0 0.0
    %571 = vmatprep.subr.mxu0 0.0
    %572 = vmatpush2.msra.mxu0 0.0
    %573 = vmatprep.subr.mxu0 0.0
    %574 = vmatpush2.msra.mxu0 0.0
    %575 = vmatprep.subr.mxu0 0.0
    %576 = vmatpush2.msra.mxu0 0.0
    %577 = vmatprep.subr.mxu0 0.0
    %578 = vmatpush2.msra.mxu0 0.0
    %579 = vmatprep.mubr.f32.mxu0 0.0
    %580 = vmatmul.mubr.f32.gmra.mxu0 %v510
    %v581 = vpop.f32.mrf.mxu0
    %v582 = vadd.f32 0.0, %v581
    %v583 = vpop.f32.mrf.mxu0
    %584 = vmatprep.mubr.f32.mxu0 0.0
    %585 = vmatmul.mubr.f32.gmra.mxu0 %v513
    %v586 = vpop.f32.mrf.mxu0
    %v587 = vadd.f32 0.0, %v586
    %v588 = vpop.f32.mrf.mxu0
    %589 = vdwg.mxu0
    %v591 = vsel %vm355, %v351, 0
    %v594 = vsel %vm355, %v352, 0
    %v597 = vsel %vm355, %v353, 0
    %v600 = vsel %vm355, %v354, 0
    %602 = vmatprep.subr.mxu0 0.0
    %603 = vmatpush1.msra.mxu0 0.0
    %604 = vmatprep.subr.mxu0 0.0
    %605 = vmatpush1.msra.mxu0 0.0
    %606 = vmatprep.subr.mxu0 0.0
    %607 = vmatpush1.msra.mxu0 0.0
    %608 = vmatprep.subr.mxu0 0.0
    %609 = vmatpush1.msra.mxu0 0.0
    %610 = vmatprep.subr.mxu0 0.0
    %611 = vmatpush1.msra.mxu0 0.0
    %612 = vmatprep.subr.mxu0 0.0
    %613 = vmatpush1.msra.mxu0 0.0
    %614 = vmatprep.subr.mxu0 0.0
    %615 = vmatpush1.msra.mxu0 0.0
    %616 = vmatprep.subr.mxu0 0.0
    %617 = vmatpush1.msra.mxu0 0.0
    %618 = vmatprep.subr.mxu0 0.0
    %619 = vmatpush1.msra.mxu0 0.0
    %620 = vmatprep.subr.mxu0 0.0
    %621 = vmatpush1.msra.mxu0 0.0
    %622 = vmatprep.subr.mxu0 0.0
    %623 = vmatpush1.msra.mxu0 0.0
    %624 = vmatprep.subr.mxu0 0.0
    %625 = vmatpush1.msra.mxu0 0.0
    %626 = vmatprep.subr.mxu0 0.0
    %627 = vmatpush1.msra.mxu0 0.0
    %628 = vmatprep.subr.mxu0 0.0
    %629 = vmatpush1.msra.mxu0 0.0
    %630 = vmatprep.subr.mxu0 0.0
    %631 = vmatpush1.msra.mxu0 %v587
    %632 = vmatprep.subr.mxu0 0.0
    %633 = vmatpush1.msra.mxu0 %v582
    %634 = vmatprep.subr.mxu0 0.0
    %635 = vmatpush2.msra.mxu0 0.0
    %636 = vmatprep.subr.mxu0 0.0
    %637 = vmatpush2.msra.mxu0 0.0
    %638 = vmatprep.subr.mxu0 0.0
    %639 = vmatpush2.msra.mxu0 0.0
    %640 = vmatprep.subr.mxu0 0.0
    %641 = vmatpush2.msra.mxu0 0.0
    %642 = vmatprep.subr.mxu0 0.0
    %643 = vmatpush2.msra.mxu0 0.0
    %644 = vmatprep.subr.mxu0 0.0
    %645 = vmatpush2.msra.mxu0 0.0
    %646 = vmatprep.subr.mxu0 0.0
    %647 = vmatpush2.msra.mxu0 0.0
    %648 = vmatprep.subr.mxu0 0.0
    %649 = vmatpush2.msra.mxu0 0.0
    %650 = vmatprep.subr.mxu0 0.0
    %651 = vmatpush2.msra.mxu0 0.0
    %652 = vmatprep.subr.mxu0 0.0
    %653 = vmatpush2.msra.mxu0 0.0
    %654 = vmatprep.subr.mxu0 0.0
    %655 = vmatpush2.msra.mxu0 0.0
    %656 = vmatprep.subr.mxu0 0.0
    %657 = vmatpush2.msra.mxu0 0.0
    %658 = vmatprep.subr.mxu0 0.0
    %659 = vmatpush2.msra.mxu0 0.0
    %660 = vmatprep.subr.mxu0 0.0
    %661 = vmatpush2.msra.mxu0 0.0
    %662 = vmatprep.subr.mxu0 0.0
    %663 = vmatpush2.msra.mxu0 0.0
    %664 = vmatprep.subr.mxu0 0.0
    %665 = vmatpush2.msra.mxu0 0.0
    %666 = vmatprep.mubr.f32.mxu0 0.0
    %667 = vmatmul.mubr.f32.gmra.mxu0 %v591
    %v668 = vpop.f32.mrf.mxu0
    %v669 = vadd.f32 0.0, %v668
    %v670 = vpop.f32.mrf.mxu0
    %671 = vmatprep.mubr.f32.mxu0 0.0
    %672 = vmatmul.mubr.f32.gmra.mxu0 %v594
    %v673 = vpop.f32.mrf.mxu0
    %v674 = vadd.f32 0.0, %v673
    %v675 = vpop.f32.mrf.mxu0
    %676 = vmatprep.mubr.f32.mxu0 0.0
    %677 = vmatmul.mubr.f32.gmra.mxu0 %v597
    %v678 = vpop.f32.mrf.mxu0
    %v679 = vadd.f32 0.0, %v678
    %v680 = vpop.f32.mrf.mxu0
    %681 = vmatprep.mubr.f32.mxu0 0.0
    %682 = vmatmul.mubr.f32.gmra.mxu0 %v600
    %v683 = vpop.f32.mrf.mxu0
    %v684 = vadd.f32 0.0, %v683
    %v685 = vpop.f32.mrf.mxu0
    %686 = vdwg.mxu0
    %v687 = vadd.f32 %v141, %v669
    %v688 = vadd.f32 %v142, %v674
    %v689 = vadd.f32 %v143, %v679
    %v690 = vadd.f32 %v144, %v684
    %691 = vrot.lane.b32.xlu0 %v335, 112
    %v692 = vpop.permute.xlu0 %691
    %693 = vrot.lane.b32.xlu0 %v336, 112
    %v694 = vpop.permute.xlu0 %693
    %695 = vrot.lane.b32.xlu0 %v337, 112
    %v696 = vpop.permute.xlu0 %695
    %697 = vrot.lane.b32.xlu0 %v338, 112
    %v698 = vpop.permute.xlu0 %697
    %v699 = vsel %vm355, %v692, 0
    %v701 = vsel %vm355, %v694, 0
    %v703 = vsel %vm355, %v696, 0
    %v705 = vsel %vm355, %v698, 0
    %707 = vmatprep.subr.mxu0 0.0
    %708 = vmatpush1.msra.mxu0 0.0
    %709 = vmatprep.subr.mxu0 0.0
    %710 = vmatpush1.msra.mxu0 0.0
    %711 = vmatprep.subr.mxu0 0.0
    %712 = vmatpush1.msra.mxu0 0.0
    %713 = vmatprep.subr.mxu0 0.0
    %714 = vmatpush1.msra.mxu0 0.0
    %715 = vmatprep.subr.mxu0 0.0
    %716 = vmatpush1.msra.mxu0 0.0
    %717 = vmatprep.subr.mxu0 0.0
    %718 = vmatpush1.msra.mxu0 0.0
    %719 = vmatprep.subr.mxu0 0.0
    %720 = vmatpush1.msra.mxu0 0.0
    %721 = vmatprep.subr.mxu0 0.0
    %722 = vmatpush1.msra.mxu0 0.0
    %723 = vmatprep.subr.mxu0 0.0
    %724 = vmatpush1.msra.mxu0 0.0
    %725 = vmatprep.subr.mxu0 0.0
    %726 = vmatpush1.msra.mxu0 0.0
    %727 = vmatprep.subr.mxu0 0.0
    %728 = vmatpush1.msra.mxu0 0.0
    %729 = vmatprep.subr.mxu0 0.0
    %730 = vmatpush1.msra.mxu0 0.0
    %731 = vmatprep.subr.mxu0 0.0
    %732 = vmatpush1.msra.mxu0 0.0
    %733 = vmatprep.subr.mxu0 0.0
    %734 = vmatpush1.msra.mxu0 0.0
    %735 = vmatprep.subr.mxu0 0.0
    %736 = vmatpush1.msra.mxu0 %v296
    %737 = vmatprep.subr.mxu0 0.0
    %738 = vmatpush1.msra.mxu0 %v291
    %739 = vmatprep.subr.mxu0 0.0
    %740 = vmatpush2.msra.mxu0 0.0
    %741 = vmatprep.subr.mxu0 0.0
    %742 = vmatpush2.msra.mxu0 0.0
    %743 = vmatprep.subr.mxu0 0.0
    %744 = vmatpush2.msra.mxu0 0.0
    %745 = vmatprep.subr.mxu0 0.0
    %746 = vmatpush2.msra.mxu0 0.0
    %747 = vmatprep.subr.mxu0 0.0
    %748 = vmatpush2.msra.mxu0 0.0
    %749 = vmatprep.subr.mxu0 0.0
    %750 = vmatpush2.msra.mxu0 0.0
    %751 = vmatprep.subr.mxu0 0.0
    %752 = vmatpush2.msra.mxu0 0.0
    %753 = vmatprep.subr.mxu0 0.0
    %754 = vmatpush2.msra.mxu0 0.0
    %755 = vmatprep.subr.mxu0 0.0
    %756 = vmatpush2.msra.mxu0 0.0
    %757 = vmatprep.subr.mxu0 0.0
    %758 = vmatpush2.msra.mxu0 0.0
    %759 = vmatprep.subr.mxu0 0.0
    %760 = vmatpush2.msra.mxu0 0.0
    %761 = vmatprep.subr.mxu0 0.0
    %762 = vmatpush2.msra.mxu0 0.0
    %763 = vmatprep.subr.mxu0 0.0
    %764 = vmatpush2.msra.mxu0 0.0
    %765 = vmatprep.subr.mxu0 0.0
    %766 = vmatpush2.msra.mxu0 0.0
    %767 = vmatprep.subr.mxu0 0.0
    %768 = vmatpush2.msra.mxu0 0.0
    %769 = vmatprep.subr.mxu0 0.0
    %770 = vmatpush2.msra.mxu0 0.0
    %771 = vmatprep.mubr.f32.mxu0 0.0
    %772 = vmatmul.mubr.f32.gmra.mxu0 %v699
    %v773 = vpop.f32.mrf.mxu0
    %v774 = vadd.f32 0.0, %v773
    %v775 = vpop.f32.mrf.mxu0
    %776 = vmatprep.mubr.f32.mxu0 0.0
    %777 = vmatmul.mubr.f32.gmra.mxu0 %v701
    %v778 = vpop.f32.mrf.mxu0
    %v779 = vadd.f32 0.0, %v778
    %v780 = vpop.f32.mrf.mxu0
    %781 = vmatprep.mubr.f32.mxu0 0.0
    %782 = vmatmul.mubr.f32.gmra.mxu0 %v703
    %v783 = vpop.f32.mrf.mxu0
    %v784 = vadd.f32 0.0, %v783
    %v785 = vpop.f32.mrf.mxu0
    %786 = vmatprep.mubr.f32.mxu0 0.0
    %787 = vmatmul.mubr.f32.gmra.mxu0 %v705
    %v788 = vpop.f32.mrf.mxu0
    %v789 = vadd.f32 0.0, %v788
    %v790 = vpop.f32.mrf.mxu0
    %791 = vdwg.mxu0
    %v792 = vmul.f32 %v774, 0.25
    %v793 = vmul.f32 %v779, 0.25
    %v794 = vmul.f32 %v784, 0.25
    %v795 = vmul.f32 %v789, 0.25
    %v796 = vadd.f32 %v792, %v25
    %v797 = vadd.f32 %v793, %v26
    %v798 = vadd.f32 %v794, %v27
    %v799 = vadd.f32 %v795, %v28
    %v800 = vsel %vm157, %v796, -inf
    %801 = vmax.xlane.f32.xlu0 %v800
    %v802 = vpop.xlane.xlu0 %801
    %v803 = vsel %vm157, %v797, -inf
    %804 = vmax.xlane.f32.xlu0 %v803
    %v805 = vpop.xlane.xlu0 %804
    %v806 = vsel %vm157, %v798, -inf
    %807 = vmax.xlane.f32.xlu0 %v806
    %v808 = vpop.xlane.xlu0 %807
    %v809 = vsel %vm157, %v799, -inf
    %810 = vmax.xlane.f32.xlu0 %v809
    %v811 = vpop.xlane.xlu0 %810
    %v812 = vsub.f32 %v796, %v802
    %v813 = vsub.f32 %v797, %v805
    %v814 = vsub.f32 %v798, %v808
    %v815 = vsub.f32 %v799, %v811
    %v816 = vmul.f32 %v812, 1.442695
    %v817 = vpow.pop %v816
    %v818 = vmul.f32 %v813, 1.442695
    %v819 = vpow.pop %v818
    %v820 = vmul.f32 %v814, 1.442695
    %v821 = vpow.pop %v820
    %v822 = vmul.f32 %v815, 1.442695
    %v823 = vpow.pop %v822
    %v824 = vmul.f32 %v817, %v29
    %v825 = vmul.f32 %v819, %v30
    %v826 = vmul.f32 %v821, %v31
    %v827 = vmul.f32 %v823, %v32
    %v828 = vsel %vm157, %v824, 0.0
    %829 = vadd.xlane.f32.xlu0 %v828
    %v830 = vpop.xlane.xlu0 %829
    %v831 = vsel %vm157, %v825, 0.0
    %832 = vadd.xlane.f32.xlu0 %v831
    %v833 = vpop.xlane.xlu0 %832
    %v834 = vsel %vm157, %v826, 0.0
    %835 = vadd.xlane.f32.xlu0 %v834
    %v836 = vpop.xlane.xlu0 %835
    %v837 = vsel %vm157, %v827, 0.0
    %838 = vadd.xlane.f32.xlu0 %v837
    %v839 = vpop.xlane.xlu0 %838
    %v840 = vrcp.pop %v830
    %v841 = vrcp.pop %v833
    %v842 = vrcp.pop %v836
    %v843 = vrcp.pop %v839
    %v844 = vmul.f32 %v824, %v840
    %v845 = vmul.f32 %v825, %v841
    %v846 = vmul.f32 %v826, %v842
    %v847 = vmul.f32 %v827, %v843
    %v849 = vsel %vm157, %v311, 0
    %v852 = vsel %vm157, %v316, 0
    %854 = vmatprep.subr.mxu0 0.0
    %855 = vmatpush1.msra.mxu0 0.0
    %856 = vmatprep.subr.mxu0 0.0
    %857 = vmatpush1.msra.mxu0 0.0
    %858 = vmatprep.subr.mxu0 0.0
    %859 = vmatpush1.msra.mxu0 0.0
    %860 = vmatprep.subr.mxu0 0.0
    %861 = vmatpush1.msra.mxu0 0.0
    %862 = vmatprep.subr.mxu0 0.0
    %863 = vmatpush1.msra.mxu0 0.0
    %864 = vmatprep.subr.mxu0 0.0
    %865 = vmatpush1.msra.mxu0 0.0
    %866 = vmatprep.subr.mxu0 0.0
    %867 = vmatpush1.msra.mxu0 0.0
    %868 = vmatprep.subr.mxu0 0.0
    %869 = vmatpush1.msra.mxu0 0.0
    %870 = vmatprep.subr.mxu0 0.0
    %871 = vmatpush1.msra.mxu0 0.0
    %872 = vmatprep.subr.mxu0 0.0
    %873 = vmatpush1.msra.mxu0 0.0
    %874 = vmatprep.subr.mxu0 0.0
    %875 = vmatpush1.msra.mxu0 0.0
    %876 = vmatprep.subr.mxu0 0.0
    %877 = vmatpush1.msra.mxu0 0.0
    %878 = vmatprep.subr.mxu0 0.0
    %879 = vmatpush1.msra.mxu0 %v847
    %880 = vmatprep.subr.mxu0 0.0
    %881 = vmatpush1.msra.mxu0 %v846
    %882 = vmatprep.subr.mxu0 0.0
    %883 = vmatpush1.msra.mxu0 %v845
    %884 = vmatprep.subr.mxu0 0.0
    %885 = vmatpush1.msra.mxu0 %v844
    %886 = vmatprep.subr.mxu0 0.0
    %887 = vmatpush2.msra.mxu0 0.0
    %888 = vmatprep.subr.mxu0 0.0
    %889 = vmatpush2.msra.mxu0 0.0
    %890 = vmatprep.subr.mxu0 0.0
    %891 = vmatpush2.msra.mxu0 0.0
    %892 = vmatprep.subr.mxu0 0.0
    %893 = vmatpush2.msra.mxu0 0.0
    %894 = vmatprep.subr.mxu0 0.0
    %895 = vmatpush2.msra.mxu0 0.0
    %896 = vmatprep.subr.mxu0 0.0
    %897 = vmatpush2.msra.mxu0 0.0
    %898 = vmatprep.subr.mxu0 0.0
    %899 = vmatpush2.msra.mxu0 0.0
    %900 = vmatprep.subr.mxu0 0.0
    %901 = vmatpush2.msra.mxu0 0.0
    %902 = vmatprep.subr.mxu0 0.0
    %903 = vmatpush2.msra.mxu0 0.0
    %904 = vmatprep.subr.mxu0 0.0
    %905 = vmatpush2.msra.mxu0 0.0
    %906 = vmatprep.subr.mxu0 0.0
    %907 = vmatpush2.msra.mxu0 0.0
    %908 = vmatprep.subr.mxu0 0.0
    %909 = vmatpush2.msra.mxu0 0.0
    %910 = vmatprep.subr.mxu0 0.0
    %911 = vmatpush2.msra.mxu0 0.0
    %912 = vmatprep.subr.mxu0 0.0
    %913 = vmatpush2.msra.mxu0 0.0
    %914 = vmatprep.subr.mxu0 0.0
    %915 = vmatpush2.msra.mxu0 0.0
    %916 = vmatprep.subr.mxu0 0.0
    %917 = vmatpush2.msra.mxu0 0.0
    %918 = vmatprep.mubr.f32.mxu0 0.0
    %919 = vmatmul.mubr.f32.gmra.mxu0 %v849
    %v920 = vpop.f32.mrf.mxu0
    %v921 = vadd.f32 0.0, %v920
    %v922 = vpop.f32.mrf.mxu0
    %923 = vmatprep.mubr.f32.mxu0 0.0
    %924 = vmatmul.mubr.f32.gmra.mxu0 %v852
    %v925 = vpop.f32.mrf.mxu0
    %v926 = vadd.f32 0.0, %v925
    %v927 = vpop.f32.mrf.mxu0
    %928 = vdwg.mxu0
    %929 = vrot.lane.b32.xlu0 %v351, 112
    %v930 = vpop.permute.xlu0 %929
    %931 = vrot.lane.b32.xlu0 %v352, 112
    %v932 = vpop.permute.xlu0 %931
    %933 = vrot.lane.b32.xlu0 %v353, 112
    %v934 = vpop.permute.xlu0 %933
    %935 = vrot.lane.b32.xlu0 %v354, 112
    %v936 = vpop.permute.xlu0 %935
    %v937 = vsel %vm355, %v930, 0
    %v939 = vsel %vm355, %v932, 0
    %v941 = vsel %vm355, %v934, 0
    %v943 = vsel %vm355, %v936, 0
    %945 = vmatprep.subr.mxu0 0.0
    %946 = vmatpush1.msra.mxu0 0.0
    %947 = vmatprep.subr.mxu0 0.0
    %948 = vmatpush1.msra.mxu0 0.0
    %949 = vmatprep.subr.mxu0 0.0
    %950 = vmatpush1.msra.mxu0 0.0
    %951 = vmatprep.subr.mxu0 0.0
    %952 = vmatpush1.msra.mxu0 0.0
    %953 = vmatprep.subr.mxu0 0.0
    %954 = vmatpush1.msra.mxu0 0.0
    %955 = vmatprep.subr.mxu0 0.0
    %956 = vmatpush1.msra.mxu0 0.0
    %957 = vmatprep.subr.mxu0 0.0
    %958 = vmatpush1.msra.mxu0 0.0
    %959 = vmatprep.subr.mxu0 0.0
    %960 = vmatpush1.msra.mxu0 0.0
    %961 = vmatprep.subr.mxu0 0.0
    %962 = vmatpush1.msra.mxu0 0.0
    %963 = vmatprep.subr.mxu0 0.0
    %964 = vmatpush1.msra.mxu0 0.0
    %965 = vmatprep.subr.mxu0 0.0
    %966 = vmatpush1.msra.mxu0 0.0
    %967 = vmatprep.subr.mxu0 0.0
    %968 = vmatpush1.msra.mxu0 0.0
    %969 = vmatprep.subr.mxu0 0.0
    %970 = vmatpush1.msra.mxu0 0.0
    %971 = vmatprep.subr.mxu0 0.0
    %972 = vmatpush1.msra.mxu0 0.0
    %973 = vmatprep.subr.mxu0 0.0
    %974 = vmatpush1.msra.mxu0 %v926
    %975 = vmatprep.subr.mxu0 0.0
    %976 = vmatpush1.msra.mxu0 %v921
    %977 = vmatprep.subr.mxu0 0.0
    %978 = vmatpush2.msra.mxu0 0.0
    %979 = vmatprep.subr.mxu0 0.0
    %980 = vmatpush2.msra.mxu0 0.0
    %981 = vmatprep.subr.mxu0 0.0
    %982 = vmatpush2.msra.mxu0 0.0
    %983 = vmatprep.subr.mxu0 0.0
    %984 = vmatpush2.msra.mxu0 0.0
    %985 = vmatprep.subr.mxu0 0.0
    %986 = vmatpush2.msra.mxu0 0.0
    %987 = vmatprep.subr.mxu0 0.0
    %988 = vmatpush2.msra.mxu0 0.0
    %989 = vmatprep.subr.mxu0 0.0
    %990 = vmatpush2.msra.mxu0 0.0
    %991 = vmatprep.subr.mxu0 0.0
    %992 = vmatpush2.msra.mxu0 0.0
    %993 = vmatprep.subr.mxu0 0.0
    %994 = vmatpush2.msra.mxu0 0.0
    %995 = vmatprep.subr.mxu0 0.0
    %996 = vmatpush2.msra.mxu0 0.0
    %997 = vmatprep.subr.mxu0 0.0
    %998 = vmatpush2.msra.mxu0 0.0
    %999 = vmatprep.subr.mxu0 0.0
    %1000 = vmatpush2.msra.mxu0 0.0
    %1001 = vmatprep.subr.mxu0 0.0
    %1002 = vmatpush2.msra.mxu0 0.0
    %1003 = vmatprep.subr.mxu0 0.0
    %1004 = vmatpush2.msra.mxu0 0.0
    %1005 = vmatprep.subr.mxu0 0.0
    %1006 = vmatpush2.msra.mxu0 0.0
    %1007 = vmatprep.subr.mxu0 0.0
    %1008 = vmatpush2.msra.mxu0 0.0
    %1009 = vmatprep.mubr.f32.mxu0 0.0
    %1010 = vmatmul.mubr.f32.gmra.mxu0 %v937
    %v1011 = vpop.f32.mrf.mxu0
    %v1012 = vadd.f32 0.0, %v1011
    %v1013 = vpop.f32.mrf.mxu0
    %1014 = vmatprep.mubr.f32.mxu0 0.0
    %1015 = vmatmul.mubr.f32.gmra.mxu0 %v939
    %v1016 = vpop.f32.mrf.mxu0
    %v1017 = vadd.f32 0.0, %v1016
    %v1018 = vpop.f32.mrf.mxu0
    %1019 = vmatprep.mubr.f32.mxu0 0.0
    %1020 = vmatmul.mubr.f32.gmra.mxu0 %v941
    %v1021 = vpop.f32.mrf.mxu0
    %v1022 = vadd.f32 0.0, %v1021
    %v1023 = vpop.f32.mrf.mxu0
    %1024 = vmatprep.mubr.f32.mxu0 0.0
    %1025 = vmatmul.mubr.f32.gmra.mxu0 %v943
    %v1026 = vpop.f32.mrf.mxu0
    %v1027 = vadd.f32 0.0, %v1026
    %v1028 = vpop.f32.mrf.mxu0
    %1029 = vdwg.mxu0
    %v1030 = vadd.f32 %v687, %v1012
    %v1031 = vadd.f32 %v688, %v1017
    %v1032 = vadd.f32 %v689, %v1022
    %v1033 = vadd.f32 %v690, %v1027
    %v1034 = vld [vmem:[#allocation3 + $0xa0] sm:$0xff]
    %v1035 = vld [vmem:[#allocation3 + $0xa8] sm:$0xff]
    %v1036 = vld [vmem:[#allocation3 + $0xb0] sm:$0xff]
    %v1037 = vld [vmem:[#allocation3 + $0xb8] sm:$0xff]
    %v1038 = vld [vmem:[#allocation3 + $0xc0] sm:$0xff]
    %v1039 = vld [vmem:[#allocation3 + $0xc8] sm:$0xff]
    %v1040 = vld [vmem:[#allocation3 + $0xd0] sm:$0xff]
    %v1041 = vld [vmem:[#allocation3 + $0xd8] sm:$0xff]
    %1043 = vset.pattern.permute.xlu0 32
    %1044 = vperm.xlu0 %1043, %v1034
    %v1045 = vpop.permute.xlu0 %1044
    %1048 = vset.pattern.permute.xlu0 32
    %1049 = vperm.xlu0 %1048, %v1035
    %v1050 = vpop.permute.xlu0 %1049
    %1053 = vset.pattern.permute.xlu0 32
    %1054 = vperm.xlu0 %1053, %v1036
    %v1055 = vpop.permute.xlu0 %1054
    %1058 = vset.pattern.permute.xlu0 32
    %1059 = vperm.xlu0 %1058, %v1037
    %v1060 = vpop.permute.xlu0 %1059
    %v1062 = vsel %vm157, %v1034, 0
    %v1064 = vsel %vm157, %v1035, 0
    %v1066 = vsel %vm157, %v1036, 0
    %v1068 = vsel %vm157, %v1037, 0
    %1070 = vmatprep.subr.mxu0 0.0
    %1071 = vmatpush1.msra.mxu0 0.0
    %1072 = vmatprep.subr.mxu0 0.0
    %1073 = vmatpush1.msra.mxu0 0.0
    %1074 = vmatprep.subr.mxu0 0.0
    %1075 = vmatpush1.msra.mxu0 0.0
    %1076 = vmatprep.subr.mxu0 0.0
    %1077 = vmatpush1.msra.mxu0 0.0
    %1078 = vmatprep.subr.mxu0 0.0
    %1079 = vmatpush1.msra.mxu0 0.0
    %1080 = vmatprep.subr.mxu0 0.0
    %1081 = vmatpush1.msra.mxu0 0.0
    %1082 = vmatprep.subr.mxu0 0.0
    %1083 = vmatpush1.msra.mxu0 0.0
    %1084 = vmatprep.subr.mxu0 0.0
    %1085 = vmatpush1.msra.mxu0 0.0
    %1086 = vmatprep.subr.mxu0 0.0
    %1087 = vmatpush1.msra.mxu0 0.0
    %1088 = vmatprep.subr.mxu0 0.0
    %1089 = vmatpush1.msra.mxu0 0.0
    %1090 = vmatprep.subr.mxu0 0.0
    %1091 = vmatpush1.msra.mxu0 0.0
    %1092 = vmatprep.subr.mxu0 0.0
    %1093 = vmatpush1.msra.mxu0 0.0
    %1094 = vmatprep.subr.mxu0 0.0
    %1095 = vmatpush1.msra.mxu0 %v1033
    %1096 = vmatprep.subr.mxu0 0.0
    %1097 = vmatpush1.msra.mxu0 %v1032
    %1098 = vmatprep.subr.mxu0 0.0
    %1099 = vmatpush1.msra.mxu0 %v1031
    %1100 = vmatprep.subr.mxu0 0.0
    %1101 = vmatpush1.msra.mxu0 %v1030
    %1102 = vmatprep.subr.mxu0 0.0
    %1103 = vmatpush2.msra.mxu0 0.0
    %1104 = vmatprep.subr.mxu0 0.0
    %1105 = vmatpush2.msra.mxu0 0.0
    %1106 = vmatprep.subr.mxu0 0.0
    %1107 = vmatpush2.msra.mxu0 0.0
    %1108 = vmatprep.subr.mxu0 0.0
    %1109 = vmatpush2.msra.mxu0 0.0
    %1110 = vmatprep.subr.mxu0 0.0
    %1111 = vmatpush2.msra.mxu0 0.0
    %1112 = vmatprep.subr.mxu0 0.0
    %1113 = vmatpush2.msra.mxu0 0.0
    %1114 = vmatprep.subr.mxu0 0.0
    %1115 = vmatpush2.msra.mxu0 0.0
    %1116 = vmatprep.subr.mxu0 0.0
    %1117 = vmatpush2.msra.mxu0 0.0
    %1118 = vmatprep.subr.mxu0 0.0
    %1119 = vmatpush2.msra.mxu0 0.0
    %1120 = vmatprep.subr.mxu0 0.0
    %1121 = vmatpush2.msra.mxu0 0.0
    %1122 = vmatprep.subr.mxu0 0.0
    %1123 = vmatpush2.msra.mxu0 0.0
    %1124 = vmatprep.subr.mxu0 0.0
    %1125 = vmatpush2.msra.mxu0 0.0
    %1126 = vmatprep.subr.mxu0 0.0
    %1127 = vmatpush2.msra.mxu0 0.0
    %1128 = vmatprep.subr.mxu0 0.0
    %1129 = vmatpush2.msra.mxu0 0.0
    %1130 = vmatprep.subr.mxu0 0.0
    %1131 = vmatpush2.msra.mxu0 0.0
    %1132 = vmatprep.subr.mxu0 0.0
    %1133 = vmatpush2.msra.mxu0 0.0
    %1134 = vmatprep.mubr.f32.mxu0 0.0
    %1135 = vmatmul.mubr.f32.gmra.mxu0 %v1062
    %v1136 = vpop.f32.mrf.mxu0
    %v1137 = vadd.f32 %v1045, %v1136
    %v1138 = vpop.f32.mrf.mxu0
    %1139 = vmatprep.mubr.f32.mxu0 0.0
    %1140 = vmatmul.mubr.f32.gmra.mxu0 %v1064
    %v1141 = vpop.f32.mrf.mxu0
    %v1142 = vadd.f32 %v1050, %v1141
    %v1143 = vpop.f32.mrf.mxu0
    %1144 = vmatprep.mubr.f32.mxu0 0.0
    %1145 = vmatmul.mubr.f32.gmra.mxu0 %v1066
    %v1146 = vpop.f32.mrf.mxu0
    %v1147 = vadd.f32 %v1055, %v1146
    %v1148 = vpop.f32.mrf.mxu0
    %1149 = vmatprep.mubr.f32.mxu0 0.0
    %1150 = vmatmul.mubr.f32.gmra.mxu0 %v1068
    %v1151 = vpop.f32.mrf.mxu0
    %v1152 = vadd.f32 %v1060, %v1151
    %v1153 = vpop.f32.mrf.mxu0
    %1154 = vdwg.mxu0
    %v1155 = vmax.f32 %v1137, 0.0
    %v1156 = vmax.f32 %v1142, 0.0
    %v1157 = vmax.f32 %v1147, 0.0
    %v1158 = vmax.f32 %v1152, 0.0
    %v1160 = vsel %vm157, %v1038, 0
    %v1163 = vsel %vm157, %v1039, 0
    %v1166 = vsel %vm157, %v1040, 0
    %v1169 = vsel %vm157, %v1041, 0
    %1171 = vmatprep.subr.mxu0 0.0
    %1172 = vmatpush1.msra.mxu0 0.0
    %1173 = vmatprep.subr.mxu0 0.0
    %1174 = vmatpush1.msra.mxu0 0.0
    %1175 = vmatprep.subr.mxu0 0.0
    %1176 = vmatpush1.msra.mxu0 0.0
    %1177 = vmatprep.subr.mxu0 0.0
    %1178 = vmatpush1.msra.mxu0 0.0
    %1179 = vmatprep.subr.mxu0 0.0
    %1180 = vmatpush1.msra.mxu0 0.0
    %1181 = vmatprep.subr.mxu0 0.0
    %1182 = vmatpush1.msra.mxu0 0.0
    %1183 = vmatprep.subr.mxu0 0.0
    %1184 = vmatpush1.msra.mxu0 0.0
    %1185 = vmatprep.subr.mxu0 0.0
    %1186 = vmatpush1.msra.mxu0 0.0
    %1187 = vmatprep.subr.mxu0 0.0
    %1188 = vmatpush1.msra.mxu0 0.0
    %1189 = vmatprep.subr.mxu0 0.0
    %1190 = vmatpush1.msra.mxu0 0.0
    %1191 = vmatprep.subr.mxu0 0.0
    %1192 = vmatpush1.msra.mxu0 0.0
    %1193 = vmatprep.subr.mxu0 0.0
    %1194 = vmatpush1.msra.mxu0 0.0
    %1195 = vmatprep.subr.mxu0 0.0
    %1196 = vmatpush1.msra.mxu0 %v1158
    %1197 = vmatprep.subr.mxu0 0.0
    %1198 = vmatpush1.msra.mxu0 %v1157
    %1199 = vmatprep.subr.mxu0 0.0
    %1200 = vmatpush1.msra.mxu0 %v1156
    %1201 = vmatprep.subr.mxu0 0.0
    %1202 = vmatpush1.msra.mxu0 %v1155
    %1203 = vmatprep.subr.mxu0 0.0
    %1204 = vmatpush2.msra.mxu0 0.0
    %1205 = vmatprep.subr.mxu0 0.0
    %1206 = vmatpush2.msra.mxu0 0.0
    %1207 = vmatprep.subr.mxu0 0.0
    %1208 = vmatpush2.msra.mxu0 0.0
    %1209 = vmatprep.subr.mxu0 0.0
    %1210 = vmatpush2.msra.mxu0 0.0
    %1211 = vmatprep.subr.mxu0 0.0
    %1212 = vmatpush2.msra.mxu0 0.0
    %1213 = vmatprep.subr.mxu0 0.0
    %1214 = vmatpush2.msra.mxu0 0.0
    %1215 = vmatprep.subr.mxu0 0.0
    %1216 = vmatpush2.msra.mxu0 0.0
    %1217 = vmatprep.subr.mxu0 0.0
    %1218 = vmatpush2.msra.mxu0 0.0
    %1219 = vmatprep.subr.mxu0 0.0
    %1220 = vmatpush2.msra.mxu0 0.0
    %1221 = vmatprep.subr.mxu0 0.0
    %1222 = vmatpush2.msra.mxu0 0.0
    %1223 = vmatprep.subr.mxu0 0.0
    %1224 = vmatpush2.msra.mxu0 0.0
    %1225 = vmatprep.subr.mxu0 0.0
    %1226 = vmatpush2.msra.mxu0 0.0
    %1227 = vmatprep.subr.mxu0 0.0
    %1228 = vmatpush2.msra.mxu0 0.0
    %1229 = vmatprep.subr.mxu0 0.0
    %1230 = vmatpush2.msra.mxu0 0.0
    %1231 = vmatprep.subr.mxu0 0.0
    %1232 = vmatpush2.msra.mxu0 0.0
    %1233 = vmatprep.subr.mxu0 0.0
    %1234 = vmatpush2.msra.mxu0 0.0
    %1235 = vmatprep.mubr.f32.mxu0 0.0
    %1236 = vmatmul.mubr.f32.gmra.mxu0 %v1160
    %v1237 = vpop.f32.mrf.mxu0
    %v1238 = vadd.f32 0.0, %v1237
    %v1239 = vpop.f32.mrf.mxu0
    %1240 = vmatprep.mubr.f32.mxu0 0.0
    %1241 = vmatmul.mubr.f32.gmra.mxu0 %v1163
    %v1242 = vpop.f32.mrf.mxu0
    %v1243 = vadd.f32 0.0, %v1242
    %v1244 = vpop.f32.mrf.mxu0
    %1245 = vmatprep.mubr.f32.mxu0 0.0
    %1246 = vmatmul.mubr.f32.gmra.mxu0 %v1166
    %v1247 = vpop.f32.mrf.mxu0
    %v1248 = vadd.f32 0.0, %v1247
    %v1249 = vpop.f32.mrf.mxu0
    %1250 = vmatprep.mubr.f32.mxu0 0.0
    %1251 = vmatmul.mubr.f32.gmra.mxu0 %v1169
    %v1252 = vpop.f32.mrf.mxu0
    %v1253 = vadd.f32 0.0, %v1252
    %v1254 = vpop.f32.mrf.mxu0
    %1255 = vdwg.mxu0
    %v1256 = vadd.f32 %v1030, %v1238
    %v1257 = vadd.f32 %v1031, %v1243
    %v1258 = vadd.f32 %v1032, %v1248
    %v1259 = vadd.f32 %v1033, %v1253
    %1260 = vset.pattern.permute.xlu0 32
    %1261 = vperm.xlu0 %1260, %v1038
    %v1262 = vpop.permute.xlu0 %1261
    %1264 = vset.pattern.permute.xlu0 32
    %1265 = vperm.xlu0 %1264, %v1039
    %v1266 = vpop.permute.xlu0 %1265
    %1268 = vset.pattern.permute.xlu0 32
    %1269 = vperm.xlu0 %1268, %v1040
    %v1270 = vpop.permute.xlu0 %1269
    %1272 = vset.pattern.permute.xlu0 32
    %1273 = vperm.xlu0 %1272, %v1041
    %v1274 = vpop.permute.xlu0 %1273
    %v1276 = vadd.f32 %v1256, %v1262
    %v1277 = vadd.f32 %v1257, %v1266
    %v1278 = vadd.f32 %v1258, %v1270
    %v1279 = vadd.f32 %v1259, %v1274
    %v1280 = vld [vmem:[#allocation3 + $0xe0] sm:$0xff]
    %v1281 = vld [vmem:[#allocation3 + $0xe8] sm:$0xff]
    %v1282 = vld [vmem:[#allocation3 + $0xf0] sm:$0xff]
    %v1283 = vld [vmem:[#allocation3 + $0xf8] sm:$0xff]
    %v1284 = vld [vmem:[#allocation3 + $0x100] sm:$0xff]
    %v1285 = vld [vmem:[#allocation3 + $0x108] sm:$0xff]
    %v1286 = vld [vmem:[#allocation3 + $0x110] sm:$0xff]
    %v1287 = vld [vmem:[#allocation3 + $0x118] sm:$0xff]
    %v1288 = vld [vmem:[#allocation3 + $0x120] sm:$0xff]
    %v1289 = vld [vmem:[#allocation3 + $0x128] sm:$0xff]
    %v1290 = vld [vmem:[#allocation3 + $0x130] sm:$0xff]
    %v1291 = vld [vmem:[#allocation3 + $0x138] sm:$0xff]
    %v1293 = vsel %vm157, %v1280, 0
    %v1296 = vsel %vm157, %v1281, 0
    %v1299 = vsel %vm157, %v1282, 0
    %v1302 = vsel %vm157, %v1283, 0
    %v1305 = vsel %vm157, %v1284, 0
    %v1308 = vsel %vm157, %v1285, 0
    %v1311 = vsel %vm157, %v1286, 0
    %v1314 = vsel %vm157, %v1287, 0
    %v1317 = vsel %vm157, %v1288, 0
    %v1320 = vsel %vm157, %v1289, 0
    %v1323 = vsel %vm157, %v1290, 0
    %v1326 = vsel %vm157, %v1291, 0
    %1328 = vmatprep.subr.mxu0 0.0
    %1329 = vmatpush1.msra.mxu0 0.0
    %1330 = vmatprep.subr.mxu0 0.0
    %1331 = vmatpush1.msra.mxu0 0.0
    %1332 = vmatprep.subr.mxu0 0.0
    %1333 = vmatpush1.msra.mxu0 0.0
    %1334 = vmatprep.subr.mxu0 0.0
    %1335 = vmatpush1.msra.mxu0 0.0
    %1336 = vmatprep.subr.mxu0 0.0
    %1337 = vmatpush1.msra.mxu0 0.0
    %1338 = vmatprep.subr.mxu0 0.0
    %1339 = vmatpush1.msra.mxu0 0.0
    %1340 = vmatprep.subr.mxu0 0.0
    %1341 = vmatpush1.msra.mxu0 0.0
    %1342 = vmatprep.subr.mxu0 0.0
    %1343 = vmatpush1.msra.mxu0 0.0
    %1344 = vmatprep.subr.mxu0 0.0
    %1345 = vmatpush1.msra.mxu0 0.0
    %1346 = vmatprep.subr.mxu0 0.0
    %1347 = vmatpush1.msra.mxu0 0.0
    %1348 = vmatprep.subr.mxu0 0.0
    %1349 = vmatpush1.msra.mxu0 0.0
    %1350 = vmatprep.subr.mxu0 0.0
    %1351 = vmatpush1.msra.mxu0 0.0
    %1352 = vmatprep.subr.mxu0 0.0
    %1353 = vmatpush1.msra.mxu0 %v1279
    %1354 = vmatprep.subr.mxu0 0.0
    %1355 = vmatpush1.msra.mxu0 %v1278
    %1356 = vmatprep.subr.mxu0 0.0
    %1357 = vmatpush1.msra.mxu0 %v1277
    %1358 = vmatprep.subr.mxu0 0.0
    %1359 = vmatpush1.msra.mxu0 %v1276
    %1360 = vmatprep.subr.mxu0 0.0
    %1361 = vmatpush2.msra.mxu0 0.0
    %1362 = vmatprep.subr.mxu0 0.0
    %1363 = vmatpush2.msra.mxu0 0.0
    %1364 = vmatprep.subr.mxu0 0.0
    %1365 = vmatpush2.msra.mxu0 0.0
    %1366 = vmatprep.subr.mxu0 0.0
    %1367 = vmatpush2.msra.mxu0 0.0
    %1368 = vmatprep.subr.mxu0 0.0
    %1369 = vmatpush2.msra.mxu0 0.0
    %1370 = vmatprep.subr.mxu0 0.0
    %1371 = vmatpush2.msra.mxu0 0.0
    %1372 = vmatprep.subr.mxu0 0.0
    %1373 = vmatpush2.msra.mxu0 0.0
    %1374 = vmatprep.subr.mxu0 0.0
    %1375 = vmatpush2.msra.mxu0 0.0
    %1376 = vmatprep.subr.mxu0 0.0
    %1377 = vmatpush2.msra.mxu0 0.0
    %1378 = vmatprep.subr.mxu0 0.0
    %1379 = vmatpush2.msra.mxu0 0.0
    %1380 = vmatprep.subr.mxu0 0.0
    %1381 = vmatpush2.msra.mxu0 0.0
    %1382 = vmatprep.subr.mxu0 0.0
    %1383 = vmatpush2.msra.mxu0 0.0
    %1384 = vmatprep.subr.mxu0 0.0
    %1385 = vmatpush2.msra.mxu0 0.0
    %1386 = vmatprep.subr.mxu0 0.0
    %1387 = vmatpush2.msra.mxu0 0.0
    %1388 = vmatprep.subr.mxu0 0.0
    %1389 = vmatpush2.msra.mxu0 0.0
    %1390 = vmatprep.subr.mxu0 0.0
    %1391 = vmatpush2.msra.mxu0 0.0
    %1392 = vmatprep.mubr.f32.mxu0 0.0
    %1393 = vmatmul.mubr.f32.gmra.mxu0 %v1293
    %v1394 = vpop.f32.mrf.mxu0
    %v1395 = vadd.f32 0.0, %v1394
    %v1396 = vpop.f32.mrf.mxu0
    %1397 = vmatprep.mubr.f32.mxu0 0.0
    %1398 = vmatmul.mubr.f32.gmra.mxu0 %v1296
    %v1399 = vpop.f32.mrf.mxu0
    %v1400 = vadd.f32 0.0, %v1399
    %v1401 = vpop.f32.mrf.mxu0
    %1402 = vmatprep.mubr.f32.mxu0 0.0
    %1403 = vmatmul.mubr.f32.gmra.mxu0 %v1299
    %v1404 = vpop.f32.mrf.mxu0
    %v1405 = vadd.f32 0.0, %v1404
    %v1406 = vpop.f32.mrf.mxu0
    %1407 = vmatprep.mubr.f32.mxu0 0.0
    %1408 = vmatmul.mubr.f32.gmra.mxu0 %v1302
    %v1409 = vpop.f32.mrf.mxu0
    %v1410 = vadd.f32 0.0, %v1409
    %v1411 = vpop.f32.mrf.mxu0
    %1412 = vmatprep.mubr.f32.mxu0 0.0
    %1413 = vmatmul.mubr.f32.gmra.mxu0 %v1305
    %v1414 = vpop.f32.mrf.mxu0
    %v1415 = vadd.f32 0.0, %v1414
    %v1416 = vpop.f32.mrf.mxu0
    %1417 = vmatprep.mubr.f32.mxu0 0.0
    %1418 = vmatmul.mubr.f32.gmra.mxu0 %v1308
    %v1419 = vpop.f32.mrf.mxu0
    %v1420 = vadd.f32 0.0, %v1419
    %v1421 = vpop.f32.mrf.mxu0
    %1422 = vmatprep.mubr.f32.mxu0 0.0
    %1423 = vmatmul.mubr.f32.gmra.mxu0 %v1311
    %v1424 = vpop.f32.mrf.mxu0
    %v1425 = vadd.f32 0.0, %v1424
    %v1426 = vpop.f32.mrf.mxu0
    %1427 = vmatprep.mubr.f32.mxu0 0.0
    %1428 = vmatmul.mubr.f32.gmra.mxu0 %v1314
    %v1429 = vpop.f32.mrf.mxu0
    %v1430 = vadd.f32 0.0, %v1429
    %v1431 = vpop.f32.mrf.mxu0
    %1432 = vmatprep.mubr.f32.mxu0 0.0
    %1433 = vmatmul.mubr.f32.gmra.mxu0 %v1317
    %v1434 = vpop.f32.mrf.mxu0
    %v1435 = vadd.f32 0.0, %v1434
    %v1436 = vpop.f32.mrf.mxu0
    %1437 = vmatprep.mubr.f32.mxu0 0.0
    %1438 = vmatmul.mubr.f32.gmra.mxu0 %v1320
    %v1439 = vpop.f32.mrf.mxu0
    %v1440 = vadd.f32 0.0, %v1439
    %v1441 = vpop.f32.mrf.mxu0
    %1442 = vmatprep.mubr.f32.mxu0 0.0
    %1443 = vmatmul.mubr.f32.gmra.mxu0 %v1323
    %v1444 = vpop.f32.mrf.mxu0
    %v1445 = vadd.f32 0.0, %v1444
    %v1446 = vpop.f32.mrf.mxu0
    %1447 = vmatprep.mubr.f32.mxu0 0.0
    %1448 = vmatmul.mubr.f32.gmra.mxu0 %v1326
    %v1449 = vpop.f32.mrf.mxu0
    %v1450 = vadd.f32 0.0, %v1449
    %v1451 = vpop.f32.mrf.mxu0
    %1452 = vdwg.mxu0
    %1453 = vxpose.xlu0.b32.start [1/16] %v1395, 128
    %1454 = vxpose.xlu0.b32.cont [2/16] %v1400, 128
    %1455 = vxpose.xlu0.b32.cont [3/16] %v1405, 128
    %1456 = vxpose.xlu0.b32.cont [4/16] %v1410, 128
    %1457 = vxpose.xlu0.b32.cont [5/16] 0.0, 128
    %1458 = vxpose.xlu0.b32.cont [6/16] 0.0, 128
    %1459 = vxpose.xlu0.b32.cont [7/16] 0.0, 128
    %1460 = vxpose.xlu0.b32.cont [8/16] 0.0, 128
    %1461 = vxpose.xlu0.b32.cont [9/16] 0.0, 128
    %1462 = vxpose.xlu0.b32.cont [10/16] 0.0, 128
    %1463 = vxpose.xlu0.b32.cont [11/16] 0.0, 128
    %1464 = vxpose.xlu0.b32.cont [12/16] 0.0, 128
    %1465 = vxpose.xlu0.b32.cont [13/16] 0.0, 128
    %1466 = vxpose.xlu0.b32.cont [14/16] 0.0, 128
    %1467 = vxpose.xlu0.b32.cont [15/16] 0.0, 128
    %1468 = vxpose.xlu0.b32.end [16/16] 0.0, 128
    %v1469 = vpop.trf.xlu0
    %v1470 = vpop.trf.xlu0
    %v1471 = vpop.trf.xlu0
    %v1472 = vpop.trf.xlu0
    %v1473 = vpop.trf.xlu0
    %v1474 = vpop.trf.xlu0
    %v1475 = vpop.trf.xlu0
    %v1476 = vpop.trf.xlu0
    %v1477 = vpop.trf.xlu0
    %v1478 = vpop.trf.xlu0
    %v1479 = vpop.trf.xlu0
    %v1480 = vpop.trf.xlu0
    %v1481 = vpop.trf.xlu0
    %v1482 = vpop.trf.xlu0
    %v1483 = vpop.trf.xlu0
    %v1484 = vpop.trf.xlu0
    %v1485 = vld [vmem:[#allocation3 + $0x140] sm:$0xff]
    %v1486 = vld [vmem:[#allocation3 + $0x148] sm:$0xff]
    %v1487 = vld [vmem:[#allocation3 + $0x150] sm:$0xff]
    %v1488 = vld [vmem:[#allocation3 + $0x158] sm:$0xff]
    %v1490 = vsel %vm355, %v1469, 0
    %v1493 = vsel %vm355, %v1470, 0
    %v1496 = vsel %vm355, %v1471, 0
    %v1499 = vsel %vm355, %v1472, 0
    %1501 = vmatprep.subr.mxu0 0.0
    %1502 = vmatpush1.msra.mxu0 0.0
    %1503 = vmatprep.subr.mxu0 0.0
    %1504 = vmatpush1.msra.mxu0 0.0
    %1505 = vmatprep.subr.mxu0 0.0
    %1506 = vmatpush1.msra.mxu0 0.0
    %1507 = vmatprep.subr.mxu0 0.0
    %1508 = vmatpush1.msra.mxu0 0.0
    %1509 = vmatprep.subr.mxu0 0.0
    %1510 = vmatpush1.msra.mxu0 0.0
    %1511 = vmatprep.subr.mxu0 0.0
    %1512 = vmatpush1.msra.mxu0 0.0
    %1513 = vmatprep.subr.mxu0 0.0
    %1514 = vmatpush1.msra.mxu0 0.0
    %1515 = vmatprep.subr.mxu0 0.0
    %1516 = vmatpush1.msra.mxu0 0.0
    %1517 = vmatprep.subr.mxu0 0.0
    %1518 = vmatpush1.msra.mxu0 0.0
    %1519 = vmatprep.subr.mxu0 0.0
    %1520 = vmatpush1.msra.mxu0 0.0
    %1521 = vmatprep.subr.mxu0 0.0
    %1522 = vmatpush1.msra.mxu0 0.0
    %1523 = vmatprep.subr.mxu0 0.0
    %1524 = vmatpush1.msra.mxu0 0.0
    %1525 = vmatprep.subr.mxu0 0.0
    %1526 = vmatpush1.msra.mxu0 0.0
    %1527 = vmatprep.subr.mxu0 0.0
    %1528 = vmatpush1.msra.mxu0 0.0
    %1529 = vmatprep.subr.mxu0 0.0
    %1530 = vmatpush1.msra.mxu0 %v1420
    %1531 = vmatprep.subr.mxu0 0.0
    %1532 = vmatpush1.msra.mxu0 %v1415
    %1533 = vmatprep.subr.mxu0 0.0
    %1534 = vmatpush2.msra.mxu0 0.0
    %1535 = vmatprep.subr.mxu0 0.0
    %1536 = vmatpush2.msra.mxu0 0.0
    %1537 = vmatprep.subr.mxu0 0.0
    %1538 = vmatpush2.msra.mxu0 0.0
    %1539 = vmatprep.subr.mxu0 0.0
    %1540 = vmatpush2.msra.mxu0 0.0
    %1541 = vmatprep.subr.mxu0 0.0
    %1542 = vmatpush2.msra.mxu0 0.0
    %1543 = vmatprep.subr.mxu0 0.0
    %1544 = vmatpush2.msra.mxu0 0.0
    %1545 = vmatprep.subr.mxu0 0.0
    %1546 = vmatpush2.msra.mxu0 0.0
    %1547 = vmatprep.subr.mxu0 0.0
    %1548 = vmatpush2.msra.mxu0 0.0
    %1549 = vmatprep.subr.mxu0 0.0
    %1550 = vmatpush2.msra.mxu0 0.0
    %1551 = vmatprep.subr.mxu0 0.0
    %1552 = vmatpush2.msra.mxu0 0.0
    %1553 = vmatprep.subr.mxu0 0.0
    %1554 = vmatpush2.msra.mxu0 0.0
    %1555 = vmatprep.subr.mxu0 0.0
    %1556 = vmatpush2.msra.mxu0 0.0
    %1557 = vmatprep.subr.mxu0 0.0
    %1558 = vmatpush2.msra.mxu0 0.0
    %1559 = vmatprep.subr.mxu0 0.0
    %1560 = vmatpush2.msra.mxu0 0.0
    %1561 = vmatprep.subr.mxu0 0.0
    %1562 = vmatpush2.msra.mxu0 0.0
    %1563 = vmatprep.subr.mxu0 0.0
    %1564 = vmatpush2.msra.mxu0 0.0
    %1565 = vmatprep.mubr.f32.mxu0 0.0
    %1566 = vmatmul.mubr.f32.gmra.mxu0 %v1490
    %v1567 = vpop.f32.mrf.mxu0
    %v1568 = vadd.f32 0.0, %v1567
    %v1569 = vpop.f32.mrf.mxu0
    %1570 = vmatprep.mubr.f32.mxu0 0.0
    %1571 = vmatmul.mubr.f32.gmra.mxu0 %v1493
    %v1572 = vpop.f32.mrf.mxu0
    %v1573 = vadd.f32 0.0, %v1572
    %v1574 = vpop.f32.mrf.mxu0
    %1575 = vmatprep.mubr.f32.mxu0 0.0
    %1576 = vmatmul.mubr.f32.gmra.mxu0 %v1496
    %v1577 = vpop.f32.mrf.mxu0
    %v1578 = vadd.f32 0.0, %v1577
    %v1579 = vpop.f32.mrf.mxu0
    %1580 = vmatprep.mubr.f32.mxu0 0.0
    %1581 = vmatmul.mubr.f32.gmra.mxu0 %v1499
    %v1582 = vpop.f32.mrf.mxu0
    %v1583 = vadd.f32 0.0, %v1582
    %v1584 = vpop.f32.mrf.mxu0
    %1585 = vdwg.mxu0
    %v1586 = vmul.f32 %v1568, 0.25
    %v1587 = vmul.f32 %v1573, 0.25
    %v1588 = vmul.f32 %v1578, 0.25
    %v1589 = vmul.f32 %v1583, 0.25
    %v1590 = vadd.f32 %v1586, %v25
    %v1591 = vadd.f32 %v1587, %v26
    %v1592 = vadd.f32 %v1588, %v27
    %v1593 = vadd.f32 %v1589, %v28
    %v1594 = vsel %vm157, %v1590, -inf
    %1595 = vmax.xlane.f32.xlu0 %v1594
    %v1596 = vpop.xlane.xlu0 %1595
    %v1597 = vsel %vm157, %v1591, -inf
    %1598 = vmax.xlane.f32.xlu0 %v1597
    %v1599 = vpop.xlane.xlu0 %1598
    %v1600 = vsel %vm157, %v1592, -inf
    %1601 = vmax.xlane.f32.xlu0 %v1600
    %v1602 = vpop.xlane.xlu0 %1601
    %v1603 = vsel %vm157, %v1593, -inf
    %1604 = vmax.xlane.f32.xlu0 %v1603
    %v1605 = vpop.xlane.xlu0 %1604
    %v1606 = vsub.f32 %v1590, %v1596
    %v1607 = vsub.f32 %v1591, %v1599
    %v1608 = vsub.f32 %v1592, %v1602
    %v1609 = vsub.f32 %v1593, %v1605
    %v1610 = vmul.f32 %v1606, 1.442695
    %v1611 = vpow.pop %v1610
    %v1612 = vmul.f32 %v1607, 1.442695
    %v1613 = vpow.pop %v1612
    %v1614 = vmul.f32 %v1608, 1.442695
    %v1615 = vpow.pop %v1614
    %v1616 = vmul.f32 %v1609, 1.442695
    %v1617 = vpow.pop %v1616
    %v1618 = vmul.f32 %v1611, %v29
    %v1619 = vmul.f32 %v1613, %v30
    %v1620 = vmul.f32 %v1615, %v31
    %v1621 = vmul.f32 %v1617, %v32
    %v1622 = vsel %vm157, %v1618, 0.0
    %1623 = vadd.xlane.f32.xlu0 %v1622
    %v1624 = vpop.xlane.xlu0 %1623
    %v1625 = vsel %vm157, %v1619, 0.0
    %1626 = vadd.xlane.f32.xlu0 %v1625
    %v1627 = vpop.xlane.xlu0 %1626
    %v1628 = vsel %vm157, %v1620, 0.0
    %1629 = vadd.xlane.f32.xlu0 %v1628
    %v1630 = vpop.xlane.xlu0 %1629
    %v1631 = vsel %vm157, %v1621, 0.0
    %1632 = vadd.xlane.f32.xlu0 %v1631
    %v1633 = vpop.xlane.xlu0 %1632
    %v1634 = vrcp.pop %v1624
    %v1635 = vrcp.pop %v1627
    %v1636 = vrcp.pop %v1630
    %v1637 = vrcp.pop %v1633
    %v1638 = vmul.f32 %v1618, %v1634
    %v1639 = vmul.f32 %v1619, %v1635
    %v1640 = vmul.f32 %v1620, %v1636
    %v1641 = vmul.f32 %v1621, %v1637
    %v1643 = vsel %vm157, %v1435, 0
    %v1646 = vsel %vm157, %v1440, 0
    %1648 = vmatprep.subr.mxu0 0.0
    %1649 = vmatpush1.msra.mxu0 0.0
    %1650 = vmatprep.subr.mxu0 0.0
    %1651 = vmatpush1.msra.mxu0 0.0
    %1652 = vmatprep.subr.mxu0 0.0
    %1653 = vmatpush1.msra.mxu0 0.0
    %1654 = vmatprep.subr.mxu0 0.0
    %1655 = vmatpush1.msra.mxu0 0.0
    %1656 = vmatprep.subr.mxu0 0.0
    %1657 = vmatpush1.msra.mxu0 0.0
    %1658 = vmatprep.subr.mxu0 0.0
    %1659 = vmatpush1.msra.mxu0 0.0
    %1660 = vmatprep.subr.mxu0 0.0
    %1661 = vmatpush1.msra.mxu0 0.0
    %1662 = vmatprep.subr.mxu0 0.0
    %1663 = vmatpush1.msra.mxu0 0.0
    %1664 = vmatprep.subr.mxu0 0.0
    %1665 = vmatpush1.msra.mxu0 0.0
    %1666 = vmatprep.subr.mxu0 0.0
    %1667 = vmatpush1.msra.mxu0 0.0
    %1668 = vmatprep.subr.mxu0 0.0
    %1669 = vmatpush1.msra.mxu0 0.0
    %1670 = vmatprep.subr.mxu0 0.0
    %1671 = vmatpush1.msra.mxu0 0.0
    %1672 = vmatprep.subr.mxu0 0.0
    %1673 = vmatpush1.msra.mxu0 %v1641
    %1674 = vmatprep.subr.mxu0 0.0
    %1675 = vmatpush1.msra.mxu0 %v1640
    %1676 = vmatprep.subr.mxu0 0.0
    %1677 = vmatpush1.msra.mxu0 %v1639
    %1678 = vmatprep.subr.mxu0 0.0
    %1679 = vmatpush1.msra.mxu0 %v1638
    %1680 = vmatprep.subr.mxu0 0.0
    %1681 = vmatpush2.msra.mxu0 0.0
    %1682 = vmatprep.subr.mxu0 0.0
    %1683 = vmatpush2.msra.mxu0 0.0
    %1684 = vmatprep.subr.mxu0 0.0
    %1685 = vmatpush2.msra.mxu0 0.0
    %1686 = vmatprep.subr.mxu0 0.0
    %1687 = vmatpush2.msra.mxu0 0.0
    %1688 = vmatprep.subr.mxu0 0.0
    %1689 = vmatpush2.msra.mxu0 0.0
    %1690 = vmatprep.subr.mxu0 0.0
    %1691 = vmatpush2.msra.mxu0 0.0
    %1692 = vmatprep.subr.mxu0 0.0
    %1693 = vmatpush2.msra.mxu0 0.0
    %1694 = vmatprep.subr.mxu0 0.0
    %1695 = vmatpush2.msra.mxu0 0.0
    %1696 = vmatprep.subr.mxu0 0.0
    %1697 = vmatpush2.msra.mxu0 0.0
    %1698 = vmatprep.subr.mxu0 0.0
    %1699 = vmatpush2.msra.mxu0 0.0
    %1700 = vmatprep.subr.mxu0 0.0
    %1701 = vmatpush2.msra.mxu0 0.0
    %1702 = vmatprep.subr.mxu0 0.0
    %1703 = vmatpush2.msra.mxu0 0.0
    %1704 = vmatprep.subr.mxu0 0.0
    %1705 = vmatpush2.msra.mxu0 0.0
    %1706 = vmatprep.subr.mxu0 0.0
    %1707 = vmatpush2.msra.mxu0 0.0
    %1708 = vmatprep.subr.mxu0 0.0
    %1709 = vmatpush2.msra.mxu0 0.0
    %1710 = vmatprep.subr.mxu0 0.0
    %1711 = vmatpush2.msra.mxu0 0.0
    %1712 = vmatprep.mubr.f32.mxu0 0.0
    %1713 = vmatmul.mubr.f32.gmra.mxu0 %v1643
    %v1714 = vpop.f32.mrf.mxu0
    %v1715 = vadd.f32 0.0, %v1714
    %v1716 = vpop.f32.mrf.mxu0
    %1717 = vmatprep.mubr.f32.mxu0 0.0
    %1718 = vmatmul.mubr.f32.gmra.mxu0 %v1646
    %v1719 = vpop.f32.mrf.mxu0
    %v1720 = vadd.f32 0.0, %v1719
    %v1721 = vpop.f32.mrf.mxu0
    %1722 = vdwg.mxu0
    %v1724 = vsel %vm355, %v1485, 0
    %v1727 = vsel %vm355, %v1486, 0
    %v1730 = vsel %vm355, %v1487, 0
    %v1733 = vsel %vm355, %v1488, 0
    %1735 = vmatprep.subr.mxu0 0.0
    %1736 = vmatpush1.msra.mxu0 0.0
    %1737 = vmatprep.subr.mxu0 0.0
    %1738 = vmatpush1.msra.mxu0 0.0
    %1739 = vmatprep.subr.mxu0 0.0
    %1740 = vmatpush1.msra.mxu0 0.0
    %1741 = vmatprep.subr.mxu0 0.0
    %1742 = vmatpush1.msra.mxu0 0.0
    %1743 = vmatprep.subr.mxu0 0.0
    %1744 = vmatpush1.msra.mxu0 0.0
    %1745 = vmatprep.subr.mxu0 0.0
    %1746 = vmatpush1.msra.mxu0 0.0
    %1747 = vmatprep.subr.mxu0 0.0
    %1748 = vmatpush1.msra.mxu0 0.0
    %1749 = vmatprep.subr.mxu0 0.0
    %1750 = vmatpush1.msra.mxu0 0.0
    %1751 = vmatprep.subr.mxu0 0.0
    %1752 = vmatpush1.msra.mxu0 0.0
    %1753 = vmatprep.subr.mxu0 0.0
    %1754 = vmatpush1.msra.mxu0 0.0
    %1755 = vmatprep.subr.mxu0 0.0
    %1756 = vmatpush1.msra.mxu0 0.0
    %1757 = vmatprep.subr.mxu0 0.0
    %1758 = vmatpush1.msra.mxu0 0.0
    %1759 = vmatprep.subr.mxu0 0.0
    %1760 = vmatpush1.msra.mxu0 0.0
    %1761 = vmatprep.subr.mxu0 0.0
    %1762 = vmatpush1.msra.mxu0 0.0
    %1763 = vmatprep.subr.mxu0 0.0
    %1764 = vmatpush1.msra.mxu0 %v1720
    %1765 = vmatprep.subr.mxu0 0.0
    %1766 = vmatpush1.msra.mxu0 %v1715
    %1767 = vmatprep.subr.mxu0 0.0
    %1768 = vmatpush2.msra.mxu0 0.0
    %1769 = vmatprep.subr.mxu0 0.0
    %1770 = vmatpush2.msra.mxu0 0.0
    %1771 = vmatprep.subr.mxu0 0.0
    %1772 = vmatpush2.msra.mxu0 0.0
    %1773 = vmatprep.subr.mxu0 0.0
    %1774 = vmatpush2.msra.mxu0 0.0
    %1775 = vmatprep.subr.mxu0 0.0
    %1776 = vmatpush2.msra.mxu0 0.0
    %1777 = vmatprep.subr.mxu0 0.0
    %1778 = vmatpush2.msra.mxu0 0.0
    %1779 = vmatprep.subr.mxu0 0.0
    %1780 = vmatpush2.msra.mxu0 0.0
    %1781 = vmatprep.subr.mxu0 0.0
    %1782 = vmatpush2.msra.mxu0 0.0
    %1783 = vmatprep.subr.mxu0 0.0
    %1784 = vmatpush2.msra.mxu0 0.0
    %1785 = vmatprep.subr.mxu0 0.0
    %1786 = vmatpush2.msra.mxu0 0.0
    %1787 = vmatprep.subr.mxu0 0.0
    %1788 = vmatpush2.msra.mxu0 0.0
    %1789 = vmatprep.subr.mxu0 0.0
    %1790 = vmatpush2.msra.mxu0 0.0
    %1791 = vmatprep.subr.mxu0 0.0
    %1792 = vmatpush2.msra.mxu0 0.0
    %1793 = vmatprep.subr.mxu0 0.0
    %1794 = vmatpush2.msra.mxu0 0.0
    %1795 = vmatprep.subr.mxu0 0.0
    %1796 = vmatpush2.msra.mxu0 0.0
    %1797 = vmatprep.subr.mxu0 0.0
    %1798 = vmatpush2.msra.mxu0 0.0
    %1799 = vmatprep.mubr.f32.mxu0 0.0
    %1800 = vmatmul.mubr.f32.gmra.mxu0 %v1724
    %v1801 = vpop.f32.mrf.mxu0
    %v1802 = vadd.f32 0.0, %v1801
    %v1803 = vpop.f32.mrf.mxu0
    %1804 = vmatprep.mubr.f32.mxu0 0.0
    %1805 = vmatmul.mubr.f32.gmra.mxu0 %v1727
    %v1806 = vpop.f32.mrf.mxu0
    %v1807 = vadd.f32 0.0, %v1806
    %v1808 = vpop.f32.mrf.mxu0
    %1809 = vmatprep.mubr.f32.mxu0 0.0
    %1810 = vmatmul.mubr.f32.gmra.mxu0 %v1730
    %v1811 = vpop.f32.mrf.mxu0
    %v1812 = vadd.f32 0.0, %v1811
    %v1813 = vpop.f32.mrf.mxu0
    %1814 = vmatprep.mubr.f32.mxu0 0.0
    %1815 = vmatmul.mubr.f32.gmra.mxu0 %v1733
    %v1816 = vpop.f32.mrf.mxu0
    %v1817 = vadd.f32 0.0, %v1816
    %v1818 = vpop.f32.mrf.mxu0
    %1819 = vdwg.mxu0
    %v1820 = vadd.f32 %v1276, %v1802
    %v1821 = vadd.f32 %v1277, %v1807
    %v1822 = vadd.f32 %v1278, %v1812
    %v1823 = vadd.f32 %v1279, %v1817
    %1824 = vrot.lane.b32.xlu0 %v1469, 112
    %v1825 = vpop.permute.xlu0 %1824
    %1826 = vrot.lane.b32.xlu0 %v1470, 112
    %v1827 = vpop.permute.xlu0 %1826
    %1828 = vrot.lane.b32.xlu0 %v1471, 112
    %v1829 = vpop.permute.xlu0 %1828
    %1830 = vrot.lane.b32.xlu0 %v1472, 112
    %v1831 = vpop.permute.xlu0 %1830
    %v1832 = vsel %vm355, %v1825, 0
    %v1834 = vsel %vm355, %v1827, 0
    %v1836 = vsel %vm355, %v1829, 0
    %v1838 = vsel %vm355, %v1831, 0
    %1840 = vmatprep.subr.mxu0 0.0
    %1841 = vmatpush1.msra.mxu0 0.0
    %1842 = vmatprep.subr.mxu0 0.0
    %1843 = vmatpush1.msra.mxu0 0.0
    %1844 = vmatprep.subr.mxu0 0.0
    %1845 = vmatpush1.msra.mxu0 0.0
    %1846 = vmatprep.subr.mxu0 0.0
    %1847 = vmatpush1.msra.mxu0 0.0
    %1848 = vmatprep.subr.mxu0 0.0
    %1849 = vmatpush1.msra.mxu0 0.0
    %1850 = vmatprep.subr.mxu0 0.0
    %1851 = vmatpush1.msra.mxu0 0.0
    %1852 = vmatprep.subr.mxu0 0.0
    %1853 = vmatpush1.msra.mxu0 0.0
    %1854 = vmatprep.subr.mxu0 0.0
    %1855 = vmatpush1.msra.mxu0 0.0
    %1856 = vmatprep.subr.mxu0 0.0
    %1857 = vmatpush1.msra.mxu0 0.0
    %1858 = vmatprep.subr.mxu0 0.0
    %1859 = vmatpush1.msra.mxu0 0.0
    %1860 = vmatprep.subr.mxu0 0.0
    %1861 = vmatpush1.msra.mxu0 0.0
    %1862 = vmatprep.subr.mxu0 0.0
    %1863 = vmatpush1.msra.mxu0 0.0
    %1864 = vmatprep.subr.mxu0 0.0
    %1865 = vmatpush1.msra.mxu0 0.0
    %1866 = vmatprep.subr.mxu0 0.0
    %1867 = vmatpush1.msra.mxu0 0.0
    %1868 = vmatprep.subr.mxu0 0.0
    %1869 = vmatpush1.msra.mxu0 %v1430
    %1870 = vmatprep.subr.mxu0 0.0
    %1871 = vmatpush1.msra.mxu0 %v1425
    %1872 = vmatprep.subr.mxu0 0.0
    %1873 = vmatpush2.msra.mxu0 0.0
    %1874 = vmatprep.subr.mxu0 0.0
    %1875 = vmatpush2.msra.mxu0 0.0
    %1876 = vmatprep.subr.mxu0 0.0
    %1877 = vmatpush2.msra.mxu0 0.0
    %1878 = vmatprep.subr.mxu0 0.0
    %1879 = vmatpush2.msra.mxu0 0.0
    %1880 = vmatprep.subr.mxu0 0.0
    %1881 = vmatpush2.msra.mxu0 0.0
    %1882 = vmatprep.subr.mxu0 0.0
    %1883 = vmatpush2.msra.mxu0 0.0
    %1884 = vmatprep.subr.mxu0 0.0
    %1885 = vmatpush2.msra.mxu0 0.0
    %1886 = vmatprep.subr.mxu0 0.0
    %1887 = vmatpush2.msra.mxu0 0.0
    %1888 = vmatprep.subr.mxu0 0.0
    %1889 = vmatpush2.msra.mxu0 0.0
    %1890 = vmatprep.subr.mxu0 0.0
    %1891 = vmatpush2.msra.mxu0 0.0
    %1892 = vmatprep.subr.mxu0 0.0
    %1893 = vmatpush2.msra.mxu0 0.0
    %1894 = vmatprep.subr.mxu0 0.0
    %1895 = vmatpush2.msra.mxu0 0.0
    %1896 = vmatprep.subr.mxu0 0.0
    %1897 = vmatpush2.msra.mxu0 0.0
    %1898 = vmatprep.subr.mxu0 0.0
    %1899 = vmatpush2.msra.mxu0 0.0
    %1900 = vmatprep.subr.mxu0 0.0
    %1901 = vmatpush2.msra.mxu0 0.0
    %1902 = vmatprep.subr.mxu0 0.0
    %1903 = vmatpush2.msra.mxu0 0.0
    %1904 = vmatprep.mubr.f32.mxu0 0.0
    %1905 = vmatmul.mubr.f32.gmra.mxu0 %v1832
    %v1906 = vpop.f32.mrf.mxu0
    %v1907 = vadd.f32 0.0, %v1906
    %v1908 = vpop.f32.mrf.mxu0
    %1909 = vmatprep.mubr.f32.mxu0 0.0
    %1910 = vmatmul.mubr.f32.gmra.mxu0 %v1834
    %v1911 = vpop.f32.mrf.mxu0
    %v1912 = vadd.f32 0.0, %v1911
    %v1913 = vpop.f32.mrf.mxu0
    %1914 = vmatprep.mubr.f32.mxu0 0.0
    %1915 = vmatmul.mubr.f32.gmra.mxu0 %v1836
    %v1916 = vpop.f32.mrf.mxu0
    %v1917 = vadd.f32 0.0, %v1916
    %v1918 = vpop.f32.mrf.mxu0
    %1919 = vmatprep.mubr.f32.mxu0 0.0
    %1920 = vmatmul.mubr.f32.gmra.mxu0 %v1838
    %v1921 = vpop.f32.mrf.mxu0
    %v1922 = vadd.f32 0.0, %v1921
    %v1923 = vpop.f32.mrf.mxu0
    %1924 = vdwg.mxu0
    %v1925 = vmul.f32 %v1907, 0.25
    %v1926 = vmul.f32 %v1912, 0.25
    %v1927 = vmul.f32 %v1917, 0.25
    %v1928 = vmul.f32 %v1922, 0.25
    %v1929 = vadd.f32 %v1925, %v25
    %v1930 = vadd.f32 %v1926, %v26
    %v1931 = vadd.f32 %v1927, %v27
    %v1932 = vadd.f32 %v1928, %v28
    %v1933 = vsel %vm157, %v1929, -inf
    %1934 = vmax.xlane.f32.xlu0 %v1933
    %v1935 = vpop.xlane.xlu0 %1934
    %v1936 = vsel %vm157, %v1930, -inf
    %1937 = vmax.xlane.f32.xlu0 %v1936
    %v1938 = vpop.xlane.xlu0 %1937
    %v1939 = vsel %vm157, %v1931, -inf
    %1940 = vmax.xlane.f32.xlu0 %v1939
    %v1941 = vpop.xlane.xlu0 %1940
    %v1942 = vsel %vm157, %v1932, -inf
    %1943 = vmax.xlane.f32.xlu0 %v1942
    %v1944 = vpop.xlane.xlu0 %1943
    %v1945 = vsub.f32 %v1929, %v1935
    %v1946 = vsub.f32 %v1930, %v1938
    %v1947 = vsub.f32 %v1931, %v1941
    %v1948 = vsub.f32 %v1932, %v1944
    %v1949 = vmul.f32 %v1945, 1.442695
    %v1950 = vpow.pop %v1949
    %v1951 = vmul.f32 %v1946, 1.442695
    %v1952 = vpow.pop %v1951
    %v1953 = vmul.f32 %v1947, 1.442695
    %v1954 = vpow.pop %v1953
    %v1955 = vmul.f32 %v1948, 1.442695
    %v1956 = vpow.pop %v1955
    %v1957 = vmul.f32 %v1950, %v29
    %v1958 = vmul.f32 %v1952, %v30
    %v1959 = vmul.f32 %v1954, %v31
    %v1960 = vmul.f32 %v1956, %v32
    %v1961 = vsel %vm157, %v1957, 0.0
    %1962 = vadd.xlane.f32.xlu0 %v1961
    %v1963 = vpop.xlane.xlu0 %1962
    %v1964 = vsel %vm157, %v1958, 0.0
    %1965 = vadd.xlane.f32.xlu0 %v1964
    %v1966 = vpop.xlane.xlu0 %1965
    %v1967 = vsel %vm157, %v1959, 0.0
    %1968 = vadd.xlane.f32.xlu0 %v1967
    %v1969 = vpop.xlane.xlu0 %1968
    %v1970 = vsel %vm157, %v1960, 0.0
    %1971 = vadd.xlane.f32.xlu0 %v1970
    %v1972 = vpop.xlane.xlu0 %1971
    %v1973 = vrcp.pop %v1963
    %v1974 = vrcp.pop %v1966
    %v1975 = vrcp.pop %v1969
    %v1976 = vrcp.pop %v1972
    %v1977 = vmul.f32 %v1957, %v1973
    %v1978 = vmul.f32 %v1958, %v1974
    %v1979 = vmul.f32 %v1959, %v1975
    %v1980 = vmul.f32 %v1960, %v1976
    %v1982 = vsel %vm157, %v1445, 0
    %v1985 = vsel %vm157, %v1450, 0
    %1987 = vmatprep.subr.mxu0 0.0
    %1988 = vmatpush1.msra.mxu0 0.0
    %1989 = vmatprep.subr.mxu0 0.0
    %1990 = vmatpush1.msra.mxu0 0.0
    %1991 = vmatprep.subr.mxu0 0.0
    %1992 = vmatpush1.msra.mxu0 0.0
    %1993 = vmatprep.subr.mxu0 0.0
    %1994 = vmatpush1.msra.mxu0 0.0
    %1995 = vmatprep.subr.mxu0 0.0
    %1996 = vmatpush1.msra.mxu0 0.0
    %1997 = vmatprep.subr.mxu0 0.0
    %1998 = vmatpush1.msra.mxu0 0.0
    %1999 = vmatprep.subr.mxu0 0.0
    %2000 = vmatpush1.msra.mxu0 0.0
    %2001 = vmatprep.subr.mxu0 0.0
    %2002 = vmatpush1.msra.mxu0 0.0
    %2003 = vmatprep.subr.mxu0 0.0
    %2004 = vmatpush1.msra.mxu0 0.0
    %2005 = vmatprep.subr.mxu0 0.0
    %2006 = vmatpush1.msra.mxu0 0.0
    %2007 = vmatprep.subr.mxu0 0.0
    %2008 = vmatpush1.msra.mxu0 0.0
    %2009 = vmatprep.subr.mxu0 0.0
    %2010 = vmatpush1.msra.mxu0 0.0
    %2011 = vmatprep.subr.mxu0 0.0
    %2012 = vmatpush1.msra.mxu0 %v1980
    %2013 = vmatprep.subr.mxu0 0.0
    %2014 = vmatpush1.msra.mxu0 %v1979
    %2015 = vmatprep.subr.mxu0 0.0
    %2016 = vmatpush1.msra.mxu0 %v1978
    %2017 = vmatprep.subr.mxu0 0.0
    %2018 = vmatpush1.msra.mxu0 %v1977
    %2019 = vmatprep.subr.mxu0 0.0
    %2020 = vmatpush2.msra.mxu0 0.0
    %2021 = vmatprep.subr.mxu0 0.0
    %2022 = vmatpush2.msra.mxu0 0.0
    %2023 = vmatprep.subr.mxu0 0.0
    %2024 = vmatpush2.msra.mxu0 0.0
    %2025 = vmatprep.subr.mxu0 0.0
    %2026 = vmatpush2.msra.mxu0 0.0
    %2027 = vmatprep.subr.mxu0 0.0
    %2028 = vmatpush2.msra.mxu0 0.0
    %2029 = vmatprep.subr.mxu0 0.0
    %2030 = vmatpush2.msra.mxu0 0.0
    %2031 = vmatprep.subr.mxu0 0.0
    %2032 = vmatpush2.msra.mxu0 0.0
    %2033 = vmatprep.subr.mxu0 0.0
    %2034 = vmatpush2.msra.mxu0 0.0
    %2035 = vmatprep.subr.mxu0 0.0
    %2036 = vmatpush2.msra.mxu0 0.0
    %2037 = vmatprep.subr.mxu0 0.0
    %2038 = vmatpush2.msra.mxu0 0.0
    %2039 = vmatprep.subr.mxu0 0.0
    %2040 = vmatpush2.msra.mxu0 0.0
    %2041 = vmatprep.subr.mxu0 0.0
    %2042 = vmatpush2.msra.mxu0 0.0
    %2043 = vmatprep.subr.mxu0 0.0
    %2044 = vmatpush2.msra.mxu0 0.0
    %2045 = vmatprep.subr.mxu0 0.0
    %2046 = vmatpush2.msra.mxu0 0.0
    %2047 = vmatprep.subr.mxu0 0.0
    %2048 = vmatpush2.msra.mxu0 0.0
    %2049 = vmatprep.subr.mxu0 0.0
    %2050 = vmatpush2.msra.mxu0 0.0
    %2051 = vmatprep.mubr.f32.mxu0 0.0
    %2052 = vmatmul.mubr.f32.gmra.mxu0 %v1982
    %v2053 = vpop.f32.mrf.mxu0
    %v2054 = vadd.f32 0.0, %v2053
    %v2055 = vpop.f32.mrf.mxu0
    %2056 = vmatprep.mubr.f32.mxu0 0.0
    %2057 = vmatmul.mubr.f32.gmra.mxu0 %v1985
    %v2058 = vpop.f32.mrf.mxu0
    %v2059 = vadd.f32 0.0, %v2058
    %v2060 = vpop.f32.mrf.mxu0
    %2061 = vdwg.mxu0
    %2062 = vrot.lane.b32.xlu0 %v1485, 112
    %v2063 = vpop.permute.xlu0 %2062
    %2064 = vrot.lane.b32.xlu0 %v1486, 112
    %v2065 = vpop.permute.xlu0 %2064
    %2066 = vrot.lane.b32.xlu0 %v1487, 112
    %v2067 = vpop.permute.xlu0 %2066
    %2068 = vrot.lane.b32.xlu0 %v1488, 112
    %v2069 = vpop.permute.xlu0 %2068
    %v2070 = vsel %vm355, %v2063, 0
    %v2072 = vsel %vm355, %v2065, 0
    %v2074 = vsel %vm355, %v2067, 0
    %v2076 = vsel %vm355, %v2069, 0
    %2078 = vmatprep.subr.mxu0 0.0
    %2079 = vmatpush1.msra.mxu0 0.0
    %2080 = vmatprep.subr.mxu0 0.0
    %2081 = vmatpush1.msra.mxu0 0.0
    %2082 = vmatprep.subr.mxu0 0.0
    %2083 = vmatpush1.msra.mxu0 0.0
    %2084 = vmatprep.subr.mxu0 0.0
    %2085 = vmatpush1.msra.mxu0 0.0
    %2086 = vmatprep.subr.mxu0 0.0
    %2087 = vmatpush1.msra.mxu0 0.0
    %2088 = vmatprep.subr.mxu0 0.0
    %2089 = vmatpush1.msra.mxu0 0.0
    %2090 = vmatprep.subr.mxu0 0.0
    %2091 = vmatpush1.msra.mxu0 0.0
    %2092 = vmatprep.subr.mxu0 0.0
    %2093 = vmatpush1.msra.mxu0 0.0
    %2094 = vmatprep.subr.mxu0 0.0
    %2095 = vmatpush1.msra.mxu0 0.0
    %2096 = vmatprep.subr.mxu0 0.0
    %2097 = vmatpush1.msra.mxu0 0.0
    %2098 = vmatprep.subr.mxu0 0.0
    %2099 = vmatpush1.msra.mxu0 0.0
    %2100 = vmatprep.subr.mxu0 0.0
    %2101 = vmatpush1.msra.mxu0 0.0
    %2102 = vmatprep.subr.mxu0 0.0
    %2103 = vmatpush1.msra.mxu0 0.0
    %2104 = vmatprep.subr.mxu0 0.0
    %2105 = vmatpush1.msra.mxu0 0.0
    %2106 = vmatprep.subr.mxu0 0.0
    %2107 = vmatpush1.msra.mxu0 %v2059
    %2108 = vmatprep.subr.mxu0 0.0
    %2109 = vmatpush1.msra.mxu0 %v2054
    %2110 = vmatprep.subr.mxu0 0.0
    %2111 = vmatpush2.msra.mxu0 0.0
    %2112 = vmatprep.subr.mxu0 0.0
    %2113 = vmatpush2.msra.mxu0 0.0
    %2114 = vmatprep.subr.mxu0 0.0
    %2115 = vmatpush2.msra.mxu0 0.0
    %2116 = vmatprep.subr.mxu0 0.0
    %2117 = vmatpush2.msra.mxu0 0.0
    %2118 = vmatprep.subr.mxu0 0.0
    %2119 = vmatpush2.msra.mxu0 0.0
    %2120 = vmatprep.subr.mxu0 0.0
    %2121 = vmatpush2.msra.mxu0 0.0
    %2122 = vmatprep.subr.mxu0 0.0
    %2123 = vmatpush2.msra.mxu0 0.0
    %2124 = vmatprep.subr.mxu0 0.0
    %2125 = vmatpush2.msra.mxu0 0.0
    %2126 = vmatprep.subr.mxu0 0.0
    %2127 = vmatpush2.msra.mxu0 0.0
    %2128 = vmatprep.subr.mxu0 0.0
    %2129 = vmatpush2.msra.mxu0 0.0
    %2130 = vmatprep.subr.mxu0 0.0
    %2131 = vmatpush2.msra.mxu0 0.0
    %2132 = vmatprep.subr.mxu0 0.0
    %2133 = vmatpush2.msra.mxu0 0.0
    %2134 = vmatprep.subr.mxu0 0.0
    %2135 = vmatpush2.msra.mxu0 0.0
    %2136 = vmatprep.subr.mxu0 0.0
    %2137 = vmatpush2.msra.mxu0 0.0
    %2138 = vmatprep.subr.mxu0 0.0
    %2139 = vmatpush2.msra.mxu0 0.0
    %2140 = vmatprep.subr.mxu0 0.0
    %2141 = vmatpush2.msra.mxu0 0.0
    %2142 = vmatprep.mubr.f32.mxu0 0.0
    %2143 = vmatmul.mubr.f32.gmra.mxu0 %v2070
    %v2144 = vpop.f32.mrf.mxu0
    %v2145 = vadd.f32 0.0, %v2144
    %v2146 = vpop.f32.mrf.mxu0
    %2147 = vmatprep.mubr.f32.mxu0 0.0
    %2148 = vmatmul.mubr.f32.gmra.mxu0 %v2072
    %v2149 = vpop.f32.mrf.mxu0
    %v2150 = vadd.f32 0.0, %v2149
    %v2151 = vpop.f32.mrf.mxu0
    %2152 = vmatprep.mubr.f32.mxu0 0.0
    %2153 = vmatmul.mubr.f32.gmra.mxu0 %v2074
    %v2154 = vpop.f32.mrf.mxu0
    %v2155 = vadd.f32 0.0, %v2154
    %v2156 = vpop.f32.mrf.mxu0
    %2157 = vmatprep.mubr.f32.mxu0 0.0
    %2158 = vmatmul.mubr.f32.gmra.mxu0 %v2076
    %v2159 = vpop.f32.mrf.mxu0
    %v2160 = vadd.f32 0.0, %v2159
    %v2161 = vpop.f32.mrf.mxu0
    %2162 = vdwg.mxu0
    %v2163 = vadd.f32 %v1820, %v2145
    %v2164 = vadd.f32 %v1821, %v2150
    %v2165 = vadd.f32 %v1822, %v2155
    %v2166 = vadd.f32 %v1823, %v2160
    %v2167 = vld [vmem:[#allocation3 + $0x160] sm:$0xff]
    %v2168 = vld [vmem:[#allocation3 + $0x168] sm:$0xff]
    %v2169 = vld [vmem:[#allocation3 + $0x170] sm:$0xff]
    %v2170 = vld [vmem:[#allocation3 + $0x178] sm:$0xff]
    %v2171 = vld [vmem:[#allocation3 + $0x180] sm:$0xff]
    %v2172 = vld [vmem:[#allocation3 + $0x188] sm:$0xff]
    %v2173 = vld [vmem:[#allocation3 + $0x190] sm:$0xff]
    %v2174 = vld [vmem:[#allocation3 + $0x198] sm:$0xff]
    %2176 = vset.pattern.permute.xlu0 32
    %2177 = vperm.xlu0 %2176, %v2167
    %v2178 = vpop.permute.xlu0 %2177
    %2181 = vset.pattern.permute.xlu0 32
    %2182 = vperm.xlu0 %2181, %v2168
    %v2183 = vpop.permute.xlu0 %2182
    %2186 = vset.pattern.permute.xlu0 32
    %2187 = vperm.xlu0 %2186, %v2169
    %v2188 = vpop.permute.xlu0 %2187
    %2191 = vset.pattern.permute.xlu0 32
    %2192 = vperm.xlu0 %2191, %v2170
    %v2193 = vpop.permute.xlu0 %2192
    %v2195 = vsel %vm157, %v2167, 0
    %v2197 = vsel %vm157, %v2168, 0
    %v2199 = vsel %vm157, %v2169, 0
    %v2201 = vsel %vm157, %v2170, 0
    %2203 = vmatprep.subr.mxu0 0.0
    %2204 = vmatpush1.msra.mxu0 0.0
    %2205 = vmatprep.subr.mxu0 0.0
    %2206 = vmatpush1.msra.mxu0 0.0
    %2207 = vmatprep.subr.mxu0 0.0
    %2208 = vmatpush1.msra.mxu0 0.0
    %2209 = vmatprep.subr.mxu0 0.0
    %2210 = vmatpush1.msra.mxu0 0.0
    %2211 = vmatprep.subr.mxu0 0.0
    %2212 = vmatpush1.msra.mxu0 0.0
    %2213 = vmatprep.subr.mxu0 0.0
    %2214 = vmatpush1.msra.mxu0 0.0
    %2215 = vmatprep.subr.mxu0 0.0
    %2216 = vmatpush1.msra.mxu0 0.0
    %2217 = vmatprep.subr.mxu0 0.0
    %2218 = vmatpush1.msra.mxu0 0.0
    %2219 = vmatprep.subr.mxu0 0.0
    %2220 = vmatpush1.msra.mxu0 0.0
    %2221 = vmatprep.subr.mxu0 0.0
    %2222 = vmatpush1.msra.mxu0 0.0
    %2223 = vmatprep.subr.mxu0 0.0
    %2224 = vmatpush1.msra.mxu0 0.0
    %2225 = vmatprep.subr.mxu0 0.0
    %2226 = vmatpush1.msra.mxu0 0.0
    %2227 = vmatprep.subr.mxu0 0.0
    %2228 = vmatpush1.msra.mxu0 %v2166
    %2229 = vmatprep.subr.mxu0 0.0
    %2230 = vmatpush1.msra.mxu0 %v2165
    %2231 = vmatprep.subr.mxu0 0.0
    %2232 = vmatpush1.msra.mxu0 %v2164
    %2233 = vmatprep.subr.mxu0 0.0
    %2234 = vmatpush1.msra.mxu0 %v2163
    %2235 = vmatprep.subr.mxu0 0.0
    %2236 = vmatpush2.msra.mxu0 0.0
    %2237 = vmatprep.subr.mxu0 0.0
    %2238 = vmatpush2.msra.mxu0 0.0
    %2239 = vmatprep.subr.mxu0 0.0
    %2240 = vmatpush2.msra.mxu0 0.0
    %2241 = vmatprep.subr.mxu0 0.0
    %2242 = vmatpush2.msra.mxu0 0.0
    %2243 = vmatprep.subr.mxu0 0.0
    %2244 = vmatpush2.msra.mxu0 0.0
    %2245 = vmatprep.subr.mxu0 0.0
    %2246 = vmatpush2.msra.mxu0 0.0
    %2247 = vmatprep.subr.mxu0 0.0
    %2248 = vmatpush2.msra.mxu0 0.0
    %2249 = vmatprep.subr.mxu0 0.0
    %2250 = vmatpush2.msra.mxu0 0.0
    %2251 = vmatprep.subr.mxu0 0.0
    %2252 = vmatpush2.msra.mxu0 0.0
    %2253 = vmatprep.subr.mxu0 0.0
    %2254 = vmatpush2.msra.mxu0 0.0
    %2255 = vmatprep.subr.mxu0 0.0
    %2256 = vmatpush2.msra.mxu0 0.0
    %2257 = vmatprep.subr.mxu0 0.0
    %2258 = vmatpush2.msra.mxu0 0.0
    %2259 = vmatprep.subr.mxu0 0.0
    %2260 = vmatpush2.msra.mxu0 0.0
    %2261 = vmatprep.subr.mxu0 0.0
    %2262 = vmatpush2.msra.mxu0 0.0
    %2263 = vmatprep.subr.mxu0 0.0
    %2264 = vmatpush2.msra.mxu0 0.0
    %2265 = vmatprep.subr.mxu0 0.0
    %2266 = vmatpush2.msra.mxu0 0.0
    %2267 = vmatprep.mubr.f32.mxu0 0.0
    %2268 = vmatmul.mubr.f32.gmra.mxu0 %v2195
    %v2269 = vpop.f32.mrf.mxu0
    %v2270 = vadd.f32 %v2178, %v2269
    %v2271 = vpop.f32.mrf.mxu0
    %2272 = vmatprep.mubr.f32.mxu0 0.0
    %2273 = vmatmul.mubr.f32.gmra.mxu0 %v2197
    %v2274 = vpop.f32.mrf.mxu0
    %v2275 = vadd.f32 %v2183, %v2274
    %v2276 = vpop.f32.mrf.mxu0
    %2277 = vmatprep.mubr.f32.mxu0 0.0
    %2278 = vmatmul.mubr.f32.gmra.mxu0 %v2199
    %v2279 = vpop.f32.mrf.mxu0
    %v2280 = vadd.f32 %v2188, %v2279
    %v2281 = vpop.f32.mrf.mxu0
    %2282 = vmatprep.mubr.f32.mxu0 0.0
    %2283 = vmatmul.mubr.f32.gmra.mxu0 %v2201
    %v2284 = vpop.f32.mrf.mxu0
    %v2285 = vadd.f32 %v2193, %v2284
    %v2286 = vpop.f32.mrf.mxu0
    %2287 = vdwg.mxu0
    %v2288 = vmax.f32 %v2270, 0.0
    %v2289 = vmax.f32 %v2275, 0.0
    %v2290 = vmax.f32 %v2280, 0.0
    %v2291 = vmax.f32 %v2285, 0.0
    %v2293 = vsel %vm157, %v2171, 0
    %v2296 = vsel %vm157, %v2172, 0
    %v2299 = vsel %vm157, %v2173, 0
    %v2302 = vsel %vm157, %v2174, 0
    %2304 = vmatprep.subr.mxu0 0.0
    %2305 = vmatpush1.msra.mxu0 0.0
    %2306 = vmatprep.subr.mxu0 0.0
    %2307 = vmatpush1.msra.mxu0 0.0
    %2308 = vmatprep.subr.mxu0 0.0
    %2309 = vmatpush1.msra.mxu0 0.0
    %2310 = vmatprep.subr.mxu0 0.0
    %2311 = vmatpush1.msra.mxu0 0.0
    %2312 = vmatprep.subr.mxu0 0.0
    %2313 = vmatpush1.msra.mxu0 0.0
    %2314 = vmatprep.subr.mxu0 0.0
    %2315 = vmatpush1.msra.mxu0 0.0
    %2316 = vmatprep.subr.mxu0 0.0
    %2317 = vmatpush1.msra.mxu0 0.0
    %2318 = vmatprep.subr.mxu0 0.0
    %2319 = vmatpush1.msra.mxu0 0.0
    %2320 = vmatprep.subr.mxu0 0.0
    %2321 = vmatpush1.msra.mxu0 0.0
    %2322 = vmatprep.subr.mxu0 0.0
    %2323 = vmatpush1.msra.mxu0 0.0
    %2324 = vmatprep.subr.mxu0 0.0
    %2325 = vmatpush1.msra.mxu0 0.0
    %2326 = vmatprep.subr.mxu0 0.0
    %2327 = vmatpush1.msra.mxu0 0.0
    %2328 = vmatprep.subr.mxu0 0.0
    %2329 = vmatpush1.msra.mxu0 %v2291
    %2330 = vmatprep.subr.mxu0 0.0
    %2331 = vmatpush1.msra.mxu0 %v2290
    %2332 = vmatprep.subr.mxu0 0.0
    %2333 = vmatpush1.msra.mxu0 %v2289
    %2334 = vmatprep.subr.mxu0 0.0
    %2335 = vmatpush1.msra.mxu0 %v2288
    %2336 = vmatprep.subr.mxu0 0.0
    %2337 = vmatpush2.msra.mxu0 0.0
    %2338 = vmatprep.subr.mxu0 0.0
    %2339 = vmatpush2.msra.mxu0 0.0
    %2340 = vmatprep.subr.mxu0 0.0
    %2341 = vmatpush2.msra.mxu0 0.0
    %2342 = vmatprep.subr.mxu0 0.0
    %2343 = vmatpush2.msra.mxu0 0.0
    %2344 = vmatprep.subr.mxu0 0.0
    %2345 = vmatpush2.msra.mxu0 0.0
    %2346 = vmatprep.subr.mxu0 0.0
    %2347 = vmatpush2.msra.mxu0 0.0
    %2348 = vmatprep.subr.mxu0 0.0
    %2349 = vmatpush2.msra.mxu0 0.0
    %2350 = vmatprep.subr.mxu0 0.0
    %2351 = vmatpush2.msra.mxu0 0.0
    %2352 = vmatprep.subr.mxu0 0.0
    %2353 = vmatpush2.msra.mxu0 0.0
    %2354 = vmatprep.subr.mxu0 0.0
    %2355 = vmatpush2.msra.mxu0 0.0
    %2356 = vmatprep.subr.mxu0 0.0
    %2357 = vmatpush2.msra.mxu0 0.0
    %2358 = vmatprep.subr.mxu0 0.0
    %2359 = vmatpush2.msra.mxu0 0.0
    %2360 = vmatprep.subr.mxu0 0.0
    %2361 = vmatpush2.msra.mxu0 0.0
    %2362 = vmatprep.subr.mxu0 0.0
    %2363 = vmatpush2.msra.mxu0 0.0
    %2364 = vmatprep.subr.mxu0 0.0
    %2365 = vmatpush2.msra.mxu0 0.0
    %2366 = vmatprep.subr.mxu0 0.0
    %2367 = vmatpush2.msra.mxu0 0.0
    %2368 = vmatprep.mubr.f32.mxu0 0.0
    %2369 = vmatmul.mubr.f32.gmra.mxu0 %v2293
    %v2370 = vpop.f32.mrf.mxu0
    %v2371 = vadd.f32 0.0, %v2370
    %v2372 = vpop.f32.mrf.mxu0
    %2373 = vmatprep.mubr.f32.mxu0 0.0
    %2374 = vmatmul.mubr.f32.gmra.mxu0 %v2296
    %v2375 = vpop.f32.mrf.mxu0
    %v2376 = vadd.f32 0.0, %v2375
    %v2377 = vpop.f32.mrf.mxu0
    %2378 = vmatprep.mubr.f32.mxu0 0.0
    %2379 = vmatmul.mubr.f32.gmra.mxu0 %v2299
    %v2380 = vpop.f32.mrf.mxu0
    %v2381 = vadd.f32 0.0, %v2380
    %v2382 = vpop.f32.mrf.mxu0
    %2383 = vmatprep.mubr.f32.mxu0 0.0
    %2384 = vmatmul.mubr.f32.gmra.mxu0 %v2302
    %v2385 = vpop.f32.mrf.mxu0
    %v2386 = vadd.f32 0.0, %v2385
    %v2387 = vpop.f32.mrf.mxu0
    %2388 = vdwg.mxu0
    %v2389 = vadd.f32 %v2163, %v2371
    %v2390 = vadd.f32 %v2164, %v2376
    %v2391 = vadd.f32 %v2165, %v2381
    %v2392 = vadd.f32 %v2166, %v2386
    %2393 = vset.pattern.permute.xlu0 32
    %2394 = vperm.xlu0 %2393, %v2171
    %v2395 = vpop.permute.xlu0 %2394
    %2397 = vset.pattern.permute.xlu0 32
    %2398 = vperm.xlu0 %2397, %v2172
    %v2399 = vpop.permute.xlu0 %2398
    %2401 = vset.pattern.permute.xlu0 32
    %2402 = vperm.xlu0 %2401, %v2173
    %v2403 = vpop.permute.xlu0 %2402
    %2405 = vset.pattern.permute.xlu0 32
    %2406 = vperm.xlu0 %2405, %v2174
    %v2407 = vpop.permute.xlu0 %2406
    %v2409 = vadd.f32 %v2389, %v2395
    %v2410 = vadd.f32 %v2390, %v2399
    %v2411 = vadd.f32 %v2391, %v2403
    %v2412 = vadd.f32 %v2392, %v2407
    %v2413 = vld [vmem:[#allocation3 + $0x1a0] sm:$0x1]
    %2415 = vset.pattern.permute.xlu0 32
    %2416 = vperm.xlu0 %2415, %v2413
    %v2417 = vpop.permute.xlu0 %2416
    %v2419 = vsel %vm157, %v2413, 0
    %2421 = vmatprep.subr.mxu0 0.0
    %2422 = vmatpush1.msra.mxu0 0.0
    %2423 = vmatprep.subr.mxu0 0.0
    %2424 = vmatpush1.msra.mxu0 0.0
    %2425 = vmatprep.subr.mxu0 0.0
    %2426 = vmatpush1.msra.mxu0 0.0
    %2427 = vmatprep.subr.mxu0 0.0
    %2428 = vmatpush1.msra.mxu0 0.0
    %2429 = vmatprep.subr.mxu0 0.0
    %2430 = vmatpush1.msra.mxu0 0.0
    %2431 = vmatprep.subr.mxu0 0.0
    %2432 = vmatpush1.msra.mxu0 0.0
    %2433 = vmatprep.subr.mxu0 0.0
    %2434 = vmatpush1.msra.mxu0 0.0
    %2435 = vmatprep.subr.mxu0 0.0
    %2436 = vmatpush1.msra.mxu0 0.0
    %2437 = vmatprep.subr.mxu0 0.0
    %2438 = vmatpush1.msra.mxu0 0.0
    %2439 = vmatprep.subr.mxu0 0.0
    %2440 = vmatpush1.msra.mxu0 0.0
    %2441 = vmatprep.subr.mxu0 0.0
    %2442 = vmatpush1.msra.mxu0 0.0
    %2443 = vmatprep.subr.mxu0 0.0
    %2444 = vmatpush1.msra.mxu0 0.0
    %2445 = vmatprep.subr.mxu0 0.0
    %2446 = vmatpush1.msra.mxu0 %v2412
    %2447 = vmatprep.subr.mxu0 0.0
    %2448 = vmatpush1.msra.mxu0 %v2411
    %2449 = vmatprep.subr.mxu0 0.0
    %2450 = vmatpush1.msra.mxu0 %v2410
    %2451 = vmatprep.subr.mxu0 0.0
    %2452 = vmatpush1.msra.mxu0 %v2409
    %2453 = vmatprep.subr.mxu0 0.0
    %2454 = vmatpush2.msra.mxu0 0.0
    %2455 = vmatprep.subr.mxu0 0.0
    %2456 = vmatpush2.msra.mxu0 0.0
    %2457 = vmatprep.subr.mxu0 0.0
    %2458 = vmatpush2.msra.mxu0 0.0
    %2459 = vmatprep.subr.mxu0 0.0
    %2460 = vmatpush2.msra.mxu0 0.0
    %2461 = vmatprep.subr.mxu0 0.0
    %2462 = vmatpush2.msra.mxu0 0.0
    %2463 = vmatprep.subr.mxu0 0.0
    %2464 = vmatpush2.msra.mxu0 0.0
    %2465 = vmatprep.subr.mxu0 0.0
    %2466 = vmatpush2.msra.mxu0 0.0
    %2467 = vmatprep.subr.mxu0 0.0
    %2468 = vmatpush2.msra.mxu0 0.0
    %2469 = vmatprep.subr.mxu0 0.0
    %2470 = vmatpush2.msra.mxu0 0.0
    %2471 = vmatprep.subr.mxu0 0.0
    %2472 = vmatpush2.msra.mxu0 0.0
    %2473 = vmatprep.subr.mxu0 0.0
    %2474 = vmatpush2.msra.mxu0 0.0
    %2475 = vmatprep.subr.mxu0 0.0
    %2476 = vmatpush2.msra.mxu0 0.0
    %2477 = vmatprep.subr.mxu0 0.0
    %2478 = vmatpush2.msra.mxu0 0.0
    %2479 = vmatprep.subr.mxu0 0.0
    %2480 = vmatpush2.msra.mxu0 0.0
    %2481 = vmatprep.subr.mxu0 0.0
    %2482 = vmatpush2.msra.mxu0 0.0
    %2483 = vmatprep.subr.mxu0 0.0
    %2484 = vmatpush2.msra.mxu0 0.0
    %2485 = vmatprep.mubr.f32.mxu0 0.0
    %2486 = vmatmul.mubr.f32.gmra.mxu0 %v2419
    %v2487 = vpop.f32.mrf.mxu0
    %v2488 = vadd.f32 %v2417, %v2487
    %v2489 = vpop.f32.mrf.mxu0
    %2490 = vdwg.mxu0
    %vm2491 = vcmask 122880
    %2492 = vst.msk [vmem:[#allocation2] sm:$0x1] %vm2491, %v2488
    %2494 = vrot.lane.b32.xlu0 %v2488, 112
    %v2495 = vpop.permute.xlu0 %2494
    %2497 = vst.msk [vmem:[#allocation2 + $0x1] sm:$0x1] %vm2491, %v2495
    %v2498 = vld [vmem:[#allocation3 + $0x1a8] sm:$0xff]
    %v2499 = vld [vmem:[#allocation3 + $0x1b0] sm:$0xff]
    %v2500 = vld [vmem:[#allocation3 + $0x1b8] sm:$0x1]
    %v2501 = vld [vmem:[#allocation2] sm:$0x3]
    %v2502 = vlaneseq
    %v2503 = vshrl.u32 %v2502, 7
    %v2504 = vsub.s32 0, %v2503
    %v2505 = vrot.slane %v2500, %v2504
    %v2507 = vsel %vm355, %v2501, 0
    %2509 = vmatprep.subr.mxu0 0.0
    %2510 = vmatpush1.msra.mxu0 0.0
    %2511 = vmatprep.subr.mxu0 0.0
    %2512 = vmatpush1.msra.mxu0 0.0
    %2513 = vmatprep.subr.mxu0 0.0
    %2514 = vmatpush1.msra.mxu0 0.0
    %2515 = vmatprep.subr.mxu0 0.0
    %2516 = vmatpush1.msra.mxu0 0.0
    %2517 = vmatprep.subr.mxu0 0.0
    %2518 = vmatpush1.msra.mxu0 0.0
    %2519 = vmatprep.subr.mxu0 0.0
    %2520 = vmatpush1.msra.mxu0 0.0
    %2521 = vmatprep.subr.mxu0 0.0
    %2522 = vmatpush1.msra.mxu0 0.0
    %2523 = vmatprep.subr.mxu0 0.0
    %2524 = vmatpush1.msra.mxu0 0.0
    %2525 = vmatprep.subr.mxu0 0.0
    %2526 = vmatpush1.msra.mxu0 0.0
    %2527 = vmatprep.subr.mxu0 0.0
    %2528 = vmatpush1.msra.mxu0 0.0
    %2529 = vmatprep.subr.mxu0 0.0
    %2530 = vmatpush1.msra.mxu0 0.0
    %2531 = vmatprep.subr.mxu0 0.0
    %2532 = vmatpush1.msra.mxu0 0.0
    %2533 = vmatprep.subr.mxu0 0.0
    %2534 = vmatpush1.msra.mxu0 0.0
    %2535 = vmatprep.subr.mxu0 0.0
    %2536 = vmatpush1.msra.mxu0 0.0
    %2537 = vmatprep.subr.mxu0 0.0
    %2538 = vmatpush1.msra.mxu0 %v2499
    %2539 = vmatprep.subr.mxu0 0.0
    %2540 = vmatpush1.msra.mxu0 %v2498
    %2541 = vmatprep.subr.mxu0 0.0
    %2542 = vmatpush2.msra.mxu0 0.0
    %2543 = vmatprep.subr.mxu0 0.0
    %2544 = vmatpush2.msra.mxu0 0.0
    %2545 = vmatprep.subr.mxu0 0.0
    %2546 = vmatpush2.msra.mxu0 0.0
    %2547 = vmatprep.subr.mxu0 0.0
    %2548 = vmatpush2.msra.mxu0 0.0
    %2549 = vmatprep.subr.mxu0 0.0
    %2550 = vmatpush2.msra.mxu0 0.0
    %2551 = vmatprep.subr.mxu0 0.0
    %2552 = vmatpush2.msra.mxu0 0.0
    %2553 = vmatprep.subr.mxu0 0.0
    %2554 = vmatpush2.msra.mxu0 0.0
    %2555 = vmatprep.subr.mxu0 0.0
    %2556 = vmatpush2.msra.mxu0 0.0
    %2557 = vmatprep.subr.mxu0 0.0
    %2558 = vmatpush2.msra.mxu0 0.0
    %2559 = vmatprep.subr.mxu0 0.0
    %2560 = vmatpush2.msra.mxu0 0.0
    %2561 = vmatprep.subr.mxu0 0.0
    %2562 = vmatpush2.msra.mxu0 0.0
    %2563 = vmatprep.subr.mxu0 0.0
    %2564 = vmatpush2.msra.mxu0 0.0
    %2565 = vmatprep.subr.mxu0 0.0
    %2566 = vmatpush2.msra.mxu0 0.0
    %2567 = vmatprep.subr.mxu0 0.0
    %2568 = vmatpush2.msra.mxu0 0.0
    %2569 = vmatprep.subr.mxu0 0.0
    %2570 = vmatpush2.msra.mxu0 0.0
    %2571 = vmatprep.subr.mxu0 0.0
    %2572 = vmatpush2.msra.mxu0 0.0
    %2573 = vmatprep.mubr.f32.mxu0 0.0
    %2574 = vmatmul.mubr.f32.gmra.mxu0 %v2507
    %v2575 = vpop.f32.mrf.mxu0
    %v2576 = vadd.f32 %v2505, %v2575
    %v2577 = vpop.f32.mrf.mxu0
    %2578 = vdwg.mxu0
    %2579 = vst [vmem:[%s2] sm:$0x3] %v2576
    // Predicated region
    $region14: #{transformer_forward.1} parent=1 // pred_check
      _
    $region15: #{transformer_forward.1} parent=1 // pred_check_branch
      %2581 = sbr.rel (0) target = $region17
    $region16: #{transformer_forward.1} parent=1 // pred_region
      _
    $region17: #{transformer_forward.1} parent=1 // pred_fallthru
      _
    // Predicated region
    $region18: #{transformer_forward.1} parent=1 // pred_check
      _
    $region19: #{transformer_forward.1} parent=1 // pred_check_branch
      %2583 = sbr.rel (0) target = $region21
    $region20: #{transformer_forward.1} parent=1 // pred_region
      _
    $region21: #{transformer_forward.1} parent=1 // pred_fallthru
      _
    %2584 = vsyncpa [#allocation4], 1

</llo_original>
